<compile_context>
chip_gen: v5e
topology: v5e:2x2
jax: 0.10.0
libtpu: 0.0.40
codegen_flags: <defaults>
</compile_context>

<pallas_src>
import functools

import jax
import jax.numpy as jnp
import numpy as np
from jax.experimental import pallas as pl
from jax.experimental.pallas import tpu as pltpu

_EPS = 1e-5
_SUBLANE = 8          # f32 sublane tile height
_MAX_BATCH_PACK = 8   # images packed per grid step (sweepable)


def _round_up(a, m):
    return (a + m - 1) // m * m


def _pick_batch_pack(n, max_pack=_MAX_BATCH_PACK):
    """Largest divisor of n that is <= max_pack (images packed per grid step)."""
    for b in range(min(n, max_pack), 0, -1):
        if n % b == 0:
            return b
    return 1


def _conv_stage(y, w_ref, s_ref, masks, patches_ref, *, W, c8):
    """One fused (reflection-pad + 3x3 conv + folded bias/BN + ReLU) stage.

    y           : (c_in, NPIX) f32, batch-packed dense pixel-flat activation
                  (NPIX = B*H*W, pixel p = n*H*W + h*W + w).
    w_ref       : (c_out, 9*c8) folded weights, tap-major (ky, kx, channel).
    s_ref       : (c_out, 1) f32 folded bias/BN shift.
    masks       : (is_w0, is_wlast, is_h0, is_hlast), each (c8, NPIX) bool,
                  precomputed & broadcast once per kernel invocation.
    patches_ref : (>= 9*c8, NPIX) f32 VMEM scratch for the matmul operand.
    Returns (c_out, NPIX) f32.
    """
    npix = y.shape[1]
    c_in = y.shape[0]
    if c8 > c_in:  # sublane-align the channel axis; matching weight cols are 0.
        y = jnp.concatenate([y, jnp.zeros((c8 - c_in, npix), y.dtype)], axis=0)
    m_w0, m_wl, m_h0, m_hl = masks

    # 9 lane-rolled copies: shifted[(r, c)][p] == y[p + r*W + c]   (XLU rolls).
    shifted = {}
    for r in (-1, 0, 1):
        for c in (-1, 0, 1):
            off = r * W + c
            shifted[(r, c)] = y if off == 0 else pltpu.roll(y, (-off) % npix, axis=1)

    # Resolve ReflectionPad2d(1) at the left/right image borders (columns).
    col = {
        -1: {r: jnp.where(m_w0, shifted[(r, 1)], shifted[(r, -1)]) for r in (-1, 0, 1)},
        0: {r: shifted[(r, 0)] for r in (-1, 0, 1)},
        1: {r: jnp.where(m_wl, shifted[(r, -1)], shifted[(r, 1)]) for r in (-1, 0, 1)},
    }

    # Resolve top/bottom borders (rows) and write each of the 9 taps into the
    # shared VMEM scratch: 8-row-aligned chunks -> plain tile copies, and the
    # scratch bounds live ranges across the fused stages.  Tap order (ky, kx)
    # row-major matches the folded weight layout.
    t = 0
    for dy in (-1, 0, 1):
        for dx in (-1, 0, 1):
            if dy == -1:
                tap = jnp.where(m_h0, col[dx][1], col[dx][-1])
            elif dy == 1:
                tap = jnp.where(m_hl, col[dx][-1], col[dx][1])
            else:
                tap = col[dx][0]
            patches_ref[t * c8:(t + 1) * c8, :] = tap
            t += 1

    wv = w_ref[...]                                            # (c_out, 9*c8)
    patches = patches_ref[0:9 * c8, :].astype(wv.dtype)        # bf16 (or f32) operand
    acc = jnp.dot(wv, patches, preferred_element_type=jnp.float32)
    return jnp.maximum(acc + s_ref[...], 0.0)                  # (c_out, NPIX) f32


def _triple_conv_kernel(x_ref, colrow_ref, w1_ref, s1_ref, w2_ref, s2_ref,
                        w3_ref, s3_ref, o_ref, patches_ref, *, H, W, B, c8s):
    hw = H * W
    npix = B * hw

    # Pack the B images of this grid step along the lane axis (dense frame).
    # Per-image chunks are H*W lanes (multiple of 128 here) -> aligned copies.
    xin = jnp.concatenate([x_ref[n] for n in range(B)], axis=1)     # (Cin, NPIX)

    # Per-lane (w, h) indices, tiled across the packed images, and the four
    # reflection-boundary masks -- computed ONCE and reused by all three
    # stages; the (1,NPIX)->(c8,NPIX) broadcast is hoisted here as well.
    cr = jnp.concatenate([colrow_ref[...]] * B, axis=1)              # (2, NPIX) i32
    w_idx, h_idx = cr[0:1, :], cr[1:2, :]
    mask_cache = {}

    def masks_for(c8):
        if c8 not in mask_cache:
            bc = lambda m: jnp.broadcast_to(m, (c8, npix))
            mask_cache[c8] = (bc(w_idx == 0), bc(w_idx == W - 1),
                              bc(h_idx == 0), bc(h_idx == H - 1))
        return mask_cache[c8]

    y = _conv_stage(xin, w1_ref, s1_ref, masks_for(c8s[0]), patches_ref,
                    W=W, c8=c8s[0])
    y = _conv_stage(y, w2_ref, s2_ref, masks_for(c8s[1]), patches_ref,
                    W=W, c8=c8s[1])
    y = _conv_stage(y, w3_ref, s3_ref, masks_for(c8s[2]), patches_ref,
                    W=W, c8=c8s[2])

    # Lane-dense store: per-image slices start at multiples of H*W (aligned).
    for n in range(B):
        o_ref[n] = y[:, n * hw:(n + 1) * hw].astype(o_ref.dtype)


def _fold_stage_params(p, c8_in, mm_dtype):
    """Fold conv bias + inference-mode BatchNorm into (weights, shift)."""
    w, b = p["w"], p["b"]
    cout, cin = w.shape[0], w.shape[1]
    scale = p["gamma"] * jax.lax.rsqrt(p["rvar"] + _EPS)            # (Cout,)
    shift = p["beta"] + (b - p["rmean"]) * scale                    # (Cout,)
    wf = (w * scale[:, None, None, None]).transpose(0, 2, 3, 1)     # (Cout, ky, kx, Cin)
    if c8_in > cin:
        wf = jnp.pad(wf, ((0, 0), (0, 0), (0, 0), (0, c8_in - cin)))
    wf = wf.reshape(cout, 9 * c8_in)
    return wf.astype(mm_dtype), shift.reshape(cout, 1).astype(jnp.float32)


@functools.partial(jax.jit, static_argnames=("use_bf16",))
def triple_conv_forward(x, params, *, use_bf16=True):
    """TripleConv.forward(x).  x is NCHW float32; returns NCHW float32.

    Inference-mode BatchNorm (running statistics); requires H, W >= 2.
    """
    N, Cin, H, W = x.shape
    assert H >= 2 and W >= 2, "ReflectionPad2d(1) needs H, W >= 2"
    HW = H * W
    B = _pick_batch_pack(N)
    NB = N // B
    NPIX = B * HW
    mm_dtype = jnp.bfloat16 if use_bf16 else jnp.float32

    cin1 = Cin
    cin2 = params["conv1"]["w"].shape[0]
    cin3 = params["conv2"]["w"].shape[0]
    Cout = params["conv3"]["w"].shape[0]
    c8s = tuple(_round_up(c, _SUBLANE) for c in (cin1, cin2, cin3))

    w1, s1 = _fold_stage_params(params["conv1"], c8s[0], mm_dtype)
    w2, s2 = _fold_stage_params(params["conv2"], c8s[1], mm_dtype)
    w3, s3 = _fold_stage_params(params["conv3"], c8s[2], mm_dtype)

    # Only wrapper-side data movement: contiguous (H,W)->(H*W) reshape of the
    # raw input (no reflection pad, no junk columns, no transpose).
    x3 = x.reshape(N, Cin, HW).astype(jnp.float32)

    # Per-pixel (w, h) indices of ONE image; tiled across the pack in-kernel.
    colrow = jnp.asarray(
        np.stack([np.tile(np.arange(W, dtype=np.int32), H),
                  np.repeat(np.arange(H, dtype=np.int32), W)], axis=0))  # (2, HW)

    kernel = functools.partial(_triple_conv_kernel, H=H, W=W, B=B, c8s=c8s)
    out3 = pl.pallas_call(
        kernel,
        out_shape=jax.ShapeDtypeStruct((N, Cout, HW), jnp.float32),
        grid=(NB,),
        in_specs=[
            pl.BlockSpec((B, Cin, HW), lambda i: (i, 0, 0)),
            pl.BlockSpec((2, HW), lambda i: (0, 0)),
            pl.BlockSpec(w1.shape, lambda i: (0, 0)),
            pl.BlockSpec(s1.shape, lambda i: (0, 0)),
            pl.BlockSpec(w2.shape, lambda i: (0, 0)),
            pl.BlockSpec(s2.shape, lambda i: (0, 0)),
            pl.BlockSpec(w3.shape, lambda i: (0, 0)),
            pl.BlockSpec(s3.shape, lambda i: (0, 0)),
        ],
        out_specs=pl.BlockSpec((B, Cout, HW), lambda i: (i, 0, 0)),
        scratch_shapes=[pltpu.VMEM((9 * max(c8s), NPIX), jnp.float32)],
        compiler_params=pltpu.CompilerParams(
            dimension_semantics=("parallel",)),
        # TODO(synk): for real image sizes add a second "parallel" grid axis
        # (spatial halo tiles) so v7x's two TensorCores stay busy even when the
        # batch grid is 1, and raise vmem_limit_bytes once the per-step tile
        # grows beyond the v5e/v6e scoped VMEM defaults.
    )(x3, colrow, w1, s1, w2, s2, w3, s3)

    # Free-ish layout plumbing only: split the already-dense H*W lane axis.
    return out3.reshape(N, Cout, H, W)


# ----------------------------------------------------------------------------
# Pure-JAX (XLA) reference of the same forward pass, for validation.
# ----------------------------------------------------------------------------
def _stage_ref(x, p):
    xp = jnp.pad(x, ((0, 0), (0, 0), (1, 1), (1, 1)), mode="reflect")
    y = jax.lax.conv_general_dilated(
        xp, p["w"], window_strides=(1, 1), padding="VALID",
        dimension_numbers=("NCHW", "OIHW", "NCHW"))
    y = y + p["b"].reshape(1, -1, 1, 1)
    scale = p["gamma"] / jnp.sqrt(p["rvar"] + _EPS)
    shift = p["beta"] - p["rmean"] * scale
    return jnp.maximum(y * scale.reshape(1, -1, 1, 1)
                       + shift.reshape(1, -1, 1, 1), 0.0)


def reference(x, params):
    y = _stage_ref(x, params["conv1"])
    y = _stage_ref(y, params["conv2"])
    return _stage_ref(y, params["conv3"])


def _make_stage_params(key, cin, cout):
    kw, kb, kg, kbe, km, kv = jax.random.split(key, 6)
    return dict(
        w=0.1 * jax.random.normal(kw, (cout, cin, 3, 3), jnp.float32),
        b=0.1 * jax.random.normal(kb, (cout,), jnp.float32),
        gamma=1.0 + 0.1 * jax.random.normal(kg, (cout,), jnp.float32),
        beta=0.1 * jax.random.normal(kbe, (cout,), jnp.float32),
        rmean=0.05 * jax.random.normal(km, (cout,), jnp.float32),
        rvar=1.0 + 0.1 * jnp.abs(jax.random.normal(kv, (cout,), jnp.float32)),
    )


if __name__ == "__main__":
    key = jax.random.PRNGKey(0)
    kx, k1, k2, k3 = jax.random.split(key, 4)

    # TripleConv(in_channels=4, mid_channel_1=8, mid_channel_2=8, out_channels=4)
    Cin, Mid1, Mid2, Cout = 4, 8, 8, 4
    x = jax.random.normal(kx, (2, Cin, 16, 16), jnp.float32)
    params = dict(
        conv1=_make_stage_params(k1, Cin, Mid1),
        conv2=_make_stage_params(k2, Mid1, Mid2),
        conv3=_make_stage_params(k3, Mid2, Cout),
    )

    ref = jax.block_until_ready(reference(x, params))

    # Exactness check of the fused algorithm with f32 MXU operands.
    out_f32 = jax.block_until_ready(triple_conv_forward(x, params, use_bf16=False))
    np.testing.assert_allclose(np.asarray(out_f32), np.asarray(ref),
                               rtol=2e-3, atol=2e-3)

    # Default fast path: bf16 MXU operands, f32 accumulation.
    out = jax.block_until_ready(triple_conv_forward(x, params, use_bf16=True))
    np.testing.assert_allclose(np.asarray(out), np.asarray(ref),
                               rtol=5e-2, atol=5e-2)

    assert out.shape == (2, Cout, 16, 16), out.shape
    print("KERNEL_OK")
</pallas_src>

<mosaic_0001>
module attributes {stable_mosaic.version = 11 : i64} {
  func.func @_triple_conv_kernel(%arg0: i32, %arg1: memref<2x4x256xf32, #tpu.memory_space<vmem>>, %arg2: memref<2x256xi32, #tpu.memory_space<vmem>>, %arg3: memref<8x72xf32, #tpu.memory_space<vmem>>, %arg4: memref<8x1xf32, #tpu.memory_space<vmem>>, %arg5: memref<8x72xf32, #tpu.memory_space<vmem>>, %arg6: memref<8x1xf32, #tpu.memory_space<vmem>>, %arg7: memref<4x72xf32, #tpu.memory_space<vmem>>, %arg8: memref<4x1xf32, #tpu.memory_space<vmem>>, %arg9: memref<2x4x256xf32, #tpu.memory_space<vmem>>, %arg10: memref<72x512xf32, #tpu.memory_space<vmem>>) attributes {dimension_semantics = [#tpu.dimension_semantics<parallel>], iteration_bounds = array<i64: 1>, scalar_prefetch = 0 : i64, scratch_operands = 1 : i64, tpu.core_type = #tpu.core_type<tc>, window_params = [{transform_indices = @transform_0, window_bounds = array<i64: 2, 4, 256>}, {pipeline_mode = #tpu.pipeline_mode<synchronous>, transform_indices = @transform_1, window_bounds = array<i64: 2, 256>}, {pipeline_mode = #tpu.pipeline_mode<synchronous>, transform_indices = @transform_2, window_bounds = array<i64: 8, 72>}, {pipeline_mode = #tpu.pipeline_mode<synchronous>, transform_indices = @transform_3, window_bounds = array<i64: 8, 1>}, {pipeline_mode = #tpu.pipeline_mode<synchronous>, transform_indices = @transform_4, window_bounds = array<i64: 8, 72>}, {pipeline_mode = #tpu.pipeline_mode<synchronous>, transform_indices = @transform_5, window_bounds = array<i64: 8, 1>}, {pipeline_mode = #tpu.pipeline_mode<synchronous>, transform_indices = @transform_6, window_bounds = array<i64: 4, 72>}, {pipeline_mode = #tpu.pipeline_mode<synchronous>, transform_indices = @transform_7, window_bounds = array<i64: 4, 1>}, {transform_indices = @transform_8, window_bounds = array<i64: 2, 4, 256>}]} {
    %c0 = arith.constant 0 : index
    %c0_0 = arith.constant 0 : index
    %c0_1 = arith.constant 0 : index
    %0 = vector.load %arg1[%c0, %c0_0, %c0_1] : memref<2x4x256xf32, #tpu.memory_space<vmem>>, vector<1x4x256xf32>
    %1 = vector.shape_cast %0 : vector<1x4x256xf32> to vector<4x256xf32>
    %c1 = arith.constant 1 : index
    %c0_2 = arith.constant 0 : index
    %c0_3 = arith.constant 0 : index
    %2 = vector.load %arg1[%c1, %c0_2, %c0_3] : memref<2x4x256xf32, #tpu.memory_space<vmem>>, vector<1x4x256xf32>
    %3 = vector.shape_cast %2 : vector<1x4x256xf32> to vector<4x256xf32>
    %4 = tpu.concatenate %1, %3 in 1 : vector<4x256xf32>, vector<4x256xf32> -> vector<4x512xf32>
    %c0_4 = arith.constant 0 : index
    %c0_5 = arith.constant 0 : index
    %5 = vector.load %arg2[%c0_4, %c0_5] : memref<2x256xi32, #tpu.memory_space<vmem>>, vector<2x256xi32>
    %6 = tpu.concatenate %5, %5 in 1 : vector<2x256xi32>, vector<2x256xi32> -> vector<2x512xi32>
    %7 = vector.extract_strided_slice %6 {offsets = [0, 0], sizes = [1, 512], strides = [1, 1]} : vector<2x512xi32> to vector<1x512xi32>
    %8 = vector.extract_strided_slice %6 {offsets = [1, 0], sizes = [1, 512], strides = [1, 1]} : vector<2x512xi32> to vector<1x512xi32>
    %c0_i32 = arith.constant 0 : i32
    %9 = vector.broadcast %c0_i32 : i32 to vector<1x512xi32>
    %10 = arith.cmpi eq, %7, %9 : vector<1x512xi32>
    %11 = vector.shape_cast %10 : vector<1x512xi1> to vector<1x512xi1>
    %12 = vector.broadcast %11 : vector<1x512xi1> to vector<8x512xi1>
    %c15_i32 = arith.constant 15 : i32
    %13 = vector.broadcast %c15_i32 : i32 to vector<1x512xi32>
    %14 = arith.cmpi eq, %7, %13 : vector<1x512xi32>
    %15 = vector.shape_cast %14 : vector<1x512xi1> to vector<1x512xi1>
    %16 = vector.broadcast %15 : vector<1x512xi1> to vector<8x512xi1>
    %c0_i32_6 = arith.constant 0 : i32
    %17 = vector.broadcast %c0_i32_6 : i32 to vector<1x512xi32>
    %18 = arith.cmpi eq, %8, %17 : vector<1x512xi32>
    %19 = vector.shape_cast %18 : vector<1x512xi1> to vector<1x512xi1>
    %20 = vector.broadcast %19 : vector<1x512xi1> to vector<8x512xi1>
    %c15_i32_7 = arith.constant 15 : i32
    %21 = vector.broadcast %c15_i32_7 : i32 to vector<1x512xi32>
    %22 = arith.cmpi eq, %8, %21 : vector<1x512xi32>
    %23 = vector.shape_cast %22 : vector<1x512xi1> to vector<1x512xi1>
    %24 = vector.broadcast %23 : vector<1x512xi1> to vector<8x512xi1>
    %cst = arith.constant 0.000000e+00 : f32
    %25 = vector.broadcast %cst : f32 to vector<4x512xf32>
    %26 = tpu.concatenate %4, %25 in 0 : vector<4x512xf32>, vector<4x512xf32> -> vector<8x512xf32>
    %c17_i32 = arith.constant 17 : i32
    %27 = tpu.dynamic_rotate %26 by %c17_i32 dim 1 : vector<8x512xf32>, i32 -> vector<8x512xf32>
    %c16_i32 = arith.constant 16 : i32
    %28 = tpu.dynamic_rotate %26 by %c16_i32 dim 1 : vector<8x512xf32>, i32 -> vector<8x512xf32>
    %c15_i32_8 = arith.constant 15 : i32
    %29 = tpu.dynamic_rotate %26 by %c15_i32_8 dim 1 : vector<8x512xf32>, i32 -> vector<8x512xf32>
    %c1_i32 = arith.constant 1 : i32
    %30 = tpu.dynamic_rotate %26 by %c1_i32 dim 1 : vector<8x512xf32>, i32 -> vector<8x512xf32>
    %c511_i32 = arith.constant 511 : i32
    %31 = tpu.dynamic_rotate %26 by %c511_i32 dim 1 : vector<8x512xf32>, i32 -> vector<8x512xf32>
    %c497_i32 = arith.constant 497 : i32
    %32 = tpu.dynamic_rotate %26 by %c497_i32 dim 1 : vector<8x512xf32>, i32 -> vector<8x512xf32>
    %c496_i32 = arith.constant 496 : i32
    %33 = tpu.dynamic_rotate %26 by %c496_i32 dim 1 : vector<8x512xf32>, i32 -> vector<8x512xf32>
    %c495_i32 = arith.constant 495 : i32
    %34 = tpu.dynamic_rotate %26 by %c495_i32 dim 1 : vector<8x512xf32>, i32 -> vector<8x512xf32>
    %35 = arith.select %12, %29, %27 : vector<8x512xi1>, vector<8x512xf32>
    %36 = arith.select %12, %31, %30 : vector<8x512xi1>, vector<8x512xf32>
    %37 = arith.select %12, %34, %32 : vector<8x512xi1>, vector<8x512xf32>
    %38 = arith.select %16, %27, %29 : vector<8x512xi1>, vector<8x512xf32>
    %39 = arith.select %16, %30, %31 : vector<8x512xi1>, vector<8x512xf32>
    %40 = arith.select %16, %32, %34 : vector<8x512xi1>, vector<8x512xf32>
    %41 = arith.select %20, %37, %35 : vector<8x512xi1>, vector<8x512xf32>
    %c0_9 = arith.constant 0 : index
    %c0_10 = arith.constant 0 : index
    %42 = vector.load %arg10[%c0_9, %c0_10] : memref<72x512xf32, #tpu.memory_space<vmem>>, vector<8x512xf32>
    tpu.vector_store %arg10[%c0_9, %c0_10], %41 {strides = array<i32>} : memref<72x512xf32, #tpu.memory_space<vmem>>, vector<8x512xf32>,
    %43 = arith.select %20, %33, %28 : vector<8x512xi1>, vector<8x512xf32>
    %c8 = arith.constant 8 : index
    %c0_11 = arith.constant 0 : index
    %44 = vector.load %arg10[%c8, %c0_11] : memref<72x512xf32, #tpu.memory_space<vmem>>, vector<8x512xf32>
    tpu.vector_store %arg10[%c8, %c0_11], %43 {strides = array<i32>} : memref<72x512xf32, #tpu.memory_space<vmem>>, vector<8x512xf32>,
    %45 = arith.select %20, %40, %38 : vector<8x512xi1>, vector<8x512xf32>
    %c16 = arith.constant 16 : index
    %c0_12 = arith.constant 0 : index
    %46 = vector.load %arg10[%c16, %c0_12] : memref<72x512xf32, #tpu.memory_space<vmem>>, vector<8x512xf32>
    tpu.vector_store %arg10[%c16, %c0_12], %45 {strides = array<i32>} : memref<72x512xf32, #tpu.memory_space<vmem>>, vector<8x512xf32>,
    %c24 = arith.constant 24 : index
    %c0_13 = arith.constant 0 : index
    %47 = vector.load %arg10[%c24, %c0_13] : memref<72x512xf32, #tpu.memory_space<vmem>>, vector<8x512xf32>
    tpu.vector_store %arg10[%c24, %c0_13], %36 {strides = array<i32>} : memref<72x512xf32, #tpu.memory_space<vmem>>, vector<8x512xf32>,
    %c32 = arith.constant 32 : index
    %c0_14 = arith.constant 0 : index
    %48 = vector.load %arg10[%c32, %c0_14] : memref<72x512xf32, #tpu.memory_space<vmem>>, vector<8x512xf32>
    tpu.vector_store %arg10[%c32, %c0_14], %26 {strides = array<i32>} : memref<72x512xf32, #tpu.memory_space<vmem>>, vector<8x512xf32>,
    %c40 = arith.constant 40 : index
    %c0_15 = arith.constant 0 : index
    %49 = vector.load %arg10[%c40, %c0_15] : memref<72x512xf32, #tpu.memory_space<vmem>>, vector<8x512xf32>
    tpu.vector_store %arg10[%c40, %c0_15], %39 {strides = array<i32>} : memref<72x512xf32, #tpu.memory_space<vmem>>, vector<8x512xf32>,
    %50 = arith.select %24, %35, %37 : vector<8x512xi1>, vector<8x512xf32>
    %c48 = arith.constant 48 : index
    %c0_16 = arith.constant 0 : index
    %51 = vector.load %arg10[%c48, %c0_16] : memref<72x512xf32, #tpu.memory_space<vmem>>, vector<8x512xf32>
    tpu.vector_store %arg10[%c48, %c0_16], %50 {strides = array<i32>} : memref<72x512xf32, #tpu.memory_space<vmem>>, vector<8x512xf32>,
    %52 = arith.select %24, %28, %33 : vector<8x512xi1>, vector<8x512xf32>
    %c56 = arith.constant 56 : index
    %c0_17 = arith.constant 0 : index
    %53 = vector.load %arg10[%c56, %c0_17] : memref<72x512xf32, #tpu.memory_space<vmem>>, vector<8x512xf32>
    tpu.vector_store %arg10[%c56, %c0_17], %52 {strides = array<i32>} : memref<72x512xf32, #tpu.memory_space<vmem>>, vector<8x512xf32>,
    %54 = arith.select %24, %38, %40 : vector<8x512xi1>, vector<8x512xf32>
    %c64 = arith.constant 64 : index
    %c0_18 = arith.constant 0 : index
    %55 = vector.load %arg10[%c64, %c0_18] : memref<72x512xf32, #tpu.memory_space<vmem>>, vector<8x512xf32>
    tpu.vector_store %arg10[%c64, %c0_18], %54 {strides = array<i32>} : memref<72x512xf32, #tpu.memory_space<vmem>>, vector<8x512xf32>,
    %c0_19 = arith.constant 0 : index
    %c0_20 = arith.constant 0 : index
    %56 = vector.load %arg3[%c0_19, %c0_20] : memref<8x72xf32, #tpu.memory_space<vmem>>, vector<8x72xf32>
    %c0_21 = arith.constant 0 : index
    %c0_22 = arith.constant 0 : index
    %57 = vector.load %arg10[%c0_21, %c0_22] : memref<72x512xf32, #tpu.memory_space<vmem>>, vector<72x512xf32>
    %cst_23 = arith.constant dense<0.000000e+00> : vector<8x512xf32>
    %58 = tpu.matmul %56, %57, %cst_23 {dimension_numbers = #tpu.dot_dimension_numbers<[1], [0], [0], [1], [0, 0, 1, 1], [], []>} : vector<8x72xf32>, vector<72x512xf32>, vector<8x512xf32> -> vector<8x512xf32>
    %c0_24 = arith.constant 0 : index
    %c0_25 = arith.constant 0 : index
    %59 = vector.load %arg4[%c0_24, %c0_25] : memref<8x1xf32, #tpu.memory_space<vmem>>, vector<8x1xf32>
    %60 = vector.broadcast %59 : vector<8x1xf32> to vector<8x512xf32>
    %61 = arith.addf %58, %60 : vector<8x512xf32>
    %cst_26 = arith.constant 0.000000e+00 : f32
    %62 = vector.broadcast %cst_26 : f32 to vector<8x512xf32>
    %63 = arith.maximumf %61, %62 : vector<8x512xf32>
    %c17_i32_27 = arith.constant 17 : i32
    %64 = tpu.dynamic_rotate %63 by %c17_i32_27 dim 1 : vector<8x512xf32>, i32 -> vector<8x512xf32>
    %c16_i32_28 = arith.constant 16 : i32
    %65 = tpu.dynamic_rotate %63 by %c16_i32_28 dim 1 : vector<8x512xf32>, i32 -> vector<8x512xf32>
    %c15_i32_29 = arith.constant 15 : i32
    %66 = tpu.dynamic_rotate %63 by %c15_i32_29 dim 1 : vector<8x512xf32>, i32 -> vector<8x512xf32>
    %c1_i32_30 = arith.constant 1 : i32
    %67 = tpu.dynamic_rotate %63 by %c1_i32_30 dim 1 : vector<8x512xf32>, i32 -> vector<8x512xf32>
    %c511_i32_31 = arith.constant 511 : i32
    %68 = tpu.dynamic_rotate %63 by %c511_i32_31 dim 1 : vector<8x512xf32>, i32 -> vector<8x512xf32>
    %c497_i32_32 = arith.constant 497 : i32
    %69 = tpu.dynamic_rotate %63 by %c497_i32_32 dim 1 : vector<8x512xf32>, i32 -> vector<8x512xf32>
    %c496_i32_33 = arith.constant 496 : i32
    %70 = tpu.dynamic_rotate %63 by %c496_i32_33 dim 1 : vector<8x512xf32>, i32 -> vector<8x512xf32>
    %c495_i32_34 = arith.constant 495 : i32
    %71 = tpu.dynamic_rotate %63 by %c495_i32_34 dim 1 : vector<8x512xf32>, i32 -> vector<8x512xf32>
    %72 = arith.select %12, %66, %64 : vector<8x512xi1>, vector<8x512xf32>
    %73 = arith.select %12, %68, %67 : vector<8x512xi1>, vector<8x512xf32>
    %74 = arith.select %12, %71, %69 : vector<8x512xi1>, vector<8x512xf32>
    %75 = arith.select %16, %64, %66 : vector<8x512xi1>, vector<8x512xf32>
    %76 = arith.select %16, %67, %68 : vector<8x512xi1>, vector<8x512xf32>
    %77 = arith.select %16, %69, %71 : vector<8x512xi1>, vector<8x512xf32>
    %78 = arith.select %20, %74, %72 : vector<8x512xi1>, vector<8x512xf32>
    %c0_35 = arith.constant 0 : index
    %c0_36 = arith.constant 0 : index
    %79 = vector.load %arg10[%c0_35, %c0_36] : memref<72x512xf32, #tpu.memory_space<vmem>>, vector<8x512xf32>
    tpu.vector_store %arg10[%c0_35, %c0_36], %78 {strides = array<i32>} : memref<72x512xf32, #tpu.memory_space<vmem>>, vector<8x512xf32>,
    %80 = arith.select %20, %70, %65 : vector<8x512xi1>, vector<8x512xf32>
    %c8_37 = arith.constant 8 : index
    %c0_38 = arith.constant 0 : index
    %81 = vector.load %arg10[%c8_37, %c0_38] : memref<72x512xf32, #tpu.memory_space<vmem>>, vector<8x512xf32>
    tpu.vector_store %arg10[%c8_37, %c0_38], %80 {strides = array<i32>} : memref<72x512xf32, #tpu.memory_space<vmem>>, vector<8x512xf32>,
    %82 = arith.select %20, %77, %75 : vector<8x512xi1>, vector<8x512xf32>
    %c16_39 = arith.constant 16 : index
    %c0_40 = arith.constant 0 : index
    %83 = vector.load %arg10[%c16_39, %c0_40] : memref<72x512xf32, #tpu.memory_space<vmem>>, vector<8x512xf32>
    tpu.vector_store %arg10[%c16_39, %c0_40], %82 {strides = array<i32>} : memref<72x512xf32, #tpu.memory_space<vmem>>, vector<8x512xf32>,
    %c24_41 = arith.constant 24 : index
    %c0_42 = arith.constant 0 : index
    %84 = vector.load %arg10[%c24_41, %c0_42] : memref<72x512xf32, #tpu.memory_space<vmem>>, vector<8x512xf32>
    tpu.vector_store %arg10[%c24_41, %c0_42], %73 {strides = array<i32>} : memref<72x512xf32, #tpu.memory_space<vmem>>, vector<8x512xf32>,
    %c32_43 = arith.constant 32 : index
    %c0_44 = arith.constant 0 : index
    %85 = vector.load %arg10[%c32_43, %c0_44] : memref<72x512xf32, #tpu.memory_space<vmem>>, vector<8x512xf32>
    tpu.vector_store %arg10[%c32_43, %c0_44], %63 {strides = array<i32>} : memref<72x512xf32, #tpu.memory_space<vmem>>, vector<8x512xf32>,
    %c40_45 = arith.constant 40 : index
    %c0_46 = arith.constant 0 : index
    %86 = vector.load %arg10[%c40_45, %c0_46] : memref<72x512xf32, #tpu.memory_space<vmem>>, vector<8x512xf32>
    tpu.vector_store %arg10[%c40_45, %c0_46], %76 {strides = array<i32>} : memref<72x512xf32, #tpu.memory_space<vmem>>, vector<8x512xf32>,
    %87 = arith.select %24, %72, %74 : vector<8x512xi1>, vector<8x512xf32>
    %c48_47 = arith.constant 48 : index
    %c0_48 = arith.constant 0 : index
    %88 = vector.load %arg10[%c48_47, %c0_48] : memref<72x512xf32, #tpu.memory_space<vmem>>, vector<8x512xf32>
    tpu.vector_store %arg10[%c48_47, %c0_48], %87 {strides = array<i32>} : memref<72x512xf32, #tpu.memory_space<vmem>>, vector<8x512xf32>,
    %89 = arith.select %24, %65, %70 : vector<8x512xi1>, vector<8x512xf32>
    %c56_49 = arith.constant 56 : index
    %c0_50 = arith.constant 0 : index
    %90 = vector.load %arg10[%c56_49, %c0_50] : memref<72x512xf32, #tpu.memory_space<vmem>>, vector<8x512xf32>
    tpu.vector_store %arg10[%c56_49, %c0_50], %89 {strides = array<i32>} : memref<72x512xf32, #tpu.memory_space<vmem>>, vector<8x512xf32>,
    %91 = arith.select %24, %75, %77 : vector<8x512xi1>, vector<8x512xf32>
    %c64_51 = arith.constant 64 : index
    %c0_52 = arith.constant 0 : index
    %92 = vector.load %arg10[%c64_51, %c0_52] : memref<72x512xf32, #tpu.memory_space<vmem>>, vector<8x512xf32>
    tpu.vector_store %arg10[%c64_51, %c0_52], %91 {strides = array<i32>} : memref<72x512xf32, #tpu.memory_space<vmem>>, vector<8x512xf32>,
    %c0_53 = arith.constant 0 : index
    %c0_54 = arith.constant 0 : index
    %93 = vector.load %arg5[%c0_53, %c0_54] : memref<8x72xf32, #tpu.memory_space<vmem>>, vector<8x72xf32>
    %c0_55 = arith.constant 0 : index
    %c0_56 = arith.constant 0 : index
    %94 = vector.load %arg10[%c0_55, %c0_56] : memref<72x512xf32, #tpu.memory_space<vmem>>, vector<72x512xf32>
    %cst_57 = arith.constant dense<0.000000e+00> : vector<8x512xf32>
    %95 = tpu.matmul %93, %94, %cst_57 {dimension_numbers = #tpu.dot_dimension_numbers<[1], [0], [0], [1], [0, 0, 1, 1], [], []>} : vector<8x72xf32>, vector<72x512xf32>, vector<8x512xf32> -> vector<8x512xf32>
    %c0_58 = arith.constant 0 : index
    %c0_59 = arith.constant 0 : index
    %96 = vector.load %arg6[%c0_58, %c0_59] : memref<8x1xf32, #tpu.memory_space<vmem>>, vector<8x1xf32>
    %97 = vector.broadcast %96 : vector<8x1xf32> to vector<8x512xf32>
    %98 = arith.addf %95, %97 : vector<8x512xf32>
    %cst_60 = arith.constant 0.000000e+00 : f32
    %99 = vector.broadcast %cst_60 : f32 to vector<8x512xf32>
    %100 = arith.maximumf %98, %99 : vector<8x512xf32>
    %c17_i32_61 = arith.constant 17 : i32
    %101 = tpu.dynamic_rotate %100 by %c17_i32_61 dim 1 : vector<8x512xf32>, i32 -> vector<8x512xf32>
    %c16_i32_62 = arith.constant 16 : i32
    %102 = tpu.dynamic_rotate %100 by %c16_i32_62 dim 1 : vector<8x512xf32>, i32 -> vector<8x512xf32>
    %c15_i32_63 = arith.constant 15 : i32
    %103 = tpu.dynamic_rotate %100 by %c15_i32_63 dim 1 : vector<8x512xf32>, i32 -> vector<8x512xf32>
    %c1_i32_64 = arith.constant 1 : i32
    %104 = tpu.dynamic_rotate %100 by %c1_i32_64 dim 1 : vector<8x512xf32>, i32 -> vector<8x512xf32>
    %c511_i32_65 = arith.constant 511 : i32
    %105 = tpu.dynamic_rotate %100 by %c511_i32_65 dim 1 : vector<8x512xf32>, i32 -> vector<8x512xf32>
    %c497_i32_66 = arith.constant 497 : i32
    %106 = tpu.dynamic_rotate %100 by %c497_i32_66 dim 1 : vector<8x512xf32>, i32 -> vector<8x512xf32>
    %c496_i32_67 = arith.constant 496 : i32
    %107 = tpu.dynamic_rotate %100 by %c496_i32_67 dim 1 : vector<8x512xf32>, i32 -> vector<8x512xf32>
    %c495_i32_68 = arith.constant 495 : i32
    %108 = tpu.dynamic_rotate %100 by %c495_i32_68 dim 1 : vector<8x512xf32>, i32 -> vector<8x512xf32>
    %109 = arith.select %12, %103, %101 : vector<8x512xi1>, vector<8x512xf32>
    %110 = arith.select %12, %105, %104 : vector<8x512xi1>, vector<8x512xf32>
    %111 = arith.select %12, %108, %106 : vector<8x512xi1>, vector<8x512xf32>
    %112 = arith.select %16, %101, %103 : vector<8x512xi1>, vector<8x512xf32>
    %113 = arith.select %16, %104, %105 : vector<8x512xi1>, vector<8x512xf32>
    %114 = arith.select %16, %106, %108 : vector<8x512xi1>, vector<8x512xf32>
    %115 = arith.select %20, %111, %109 : vector<8x512xi1>, vector<8x512xf32>
    %c0_69 = arith.constant 0 : index
    %c0_70 = arith.constant 0 : index
    %116 = vector.load %arg10[%c0_69, %c0_70] : memref<72x512xf32, #tpu.memory_space<vmem>>, vector<8x512xf32>
    tpu.vector_store %arg10[%c0_69, %c0_70], %115 {strides = array<i32>} : memref<72x512xf32, #tpu.memory_space<vmem>>, vector<8x512xf32>,
    %117 = arith.select %20, %107, %102 : vector<8x512xi1>, vector<8x512xf32>
    %c8_71 = arith.constant 8 : index
    %c0_72 = arith.constant 0 : index
    %118 = vector.load %arg10[%c8_71, %c0_72] : memref<72x512xf32, #tpu.memory_space<vmem>>, vector<8x512xf32>
    tpu.vector_store %arg10[%c8_71, %c0_72], %117 {strides = array<i32>} : memref<72x512xf32, #tpu.memory_space<vmem>>, vector<8x512xf32>,
    %119 = arith.select %20, %114, %112 : vector<8x512xi1>, vector<8x512xf32>
    %c16_73 = arith.constant 16 : index
    %c0_74 = arith.constant 0 : index
    %120 = vector.load %arg10[%c16_73, %c0_74] : memref<72x512xf32, #tpu.memory_space<vmem>>, vector<8x512xf32>
    tpu.vector_store %arg10[%c16_73, %c0_74], %119 {strides = array<i32>} : memref<72x512xf32, #tpu.memory_space<vmem>>, vector<8x512xf32>,
    %c24_75 = arith.constant 24 : index
    %c0_76 = arith.constant 0 : index
    %121 = vector.load %arg10[%c24_75, %c0_76] : memref<72x512xf32, #tpu.memory_space<vmem>>, vector<8x512xf32>
    tpu.vector_store %arg10[%c24_75, %c0_76], %110 {strides = array<i32>} : memref<72x512xf32, #tpu.memory_space<vmem>>, vector<8x512xf32>,
    %c32_77 = arith.constant 32 : index
    %c0_78 = arith.constant 0 : index
    %122 = vector.load %arg10[%c32_77, %c0_78] : memref<72x512xf32, #tpu.memory_space<vmem>>, vector<8x512xf32>
    tpu.vector_store %arg10[%c32_77, %c0_78], %100 {strides = array<i32>} : memref<72x512xf32, #tpu.memory_space<vmem>>, vector<8x512xf32>,
    %c40_79 = arith.constant 40 : index
    %c0_80 = arith.constant 0 : index
    %123 = vector.load %arg10[%c40_79, %c0_80] : memref<72x512xf32, #tpu.memory_space<vmem>>, vector<8x512xf32>
    tpu.vector_store %arg10[%c40_79, %c0_80], %113 {strides = array<i32>} : memref<72x512xf32, #tpu.memory_space<vmem>>, vector<8x512xf32>,
    %124 = arith.select %24, %109, %111 : vector<8x512xi1>, vector<8x512xf32>
    %c48_81 = arith.constant 48 : index
    %c0_82 = arith.constant 0 : index
    %125 = vector.load %arg10[%c48_81, %c0_82] : memref<72x512xf32, #tpu.memory_space<vmem>>, vector<8x512xf32>
    tpu.vector_store %arg10[%c48_81, %c0_82], %124 {strides = array<i32>} : memref<72x512xf32, #tpu.memory_space<vmem>>, vector<8x512xf32>,
    %126 = arith.select %24, %102, %107 : vector<8x512xi1>, vector<8x512xf32>
    %c56_83 = arith.constant 56 : index
    %c0_84 = arith.constant 0 : index
    %127 = vector.load %arg10[%c56_83, %c0_84] : memref<72x512xf32, #tpu.memory_space<vmem>>, vector<8x512xf32>
    tpu.vector_store %arg10[%c56_83, %c0_84], %126 {strides = array<i32>} : memref<72x512xf32, #tpu.memory_space<vmem>>, vector<8x512xf32>,
    %128 = arith.select %24, %112, %114 : vector<8x512xi1>, vector<8x512xf32>
    %c64_85 = arith.constant 64 : index
    %c0_86 = arith.constant 0 : index
    %129 = vector.load %arg10[%c64_85, %c0_86] : memref<72x512xf32, #tpu.memory_space<vmem>>, vector<8x512xf32>
    tpu.vector_store %arg10[%c64_85, %c0_86], %128 {strides = array<i32>} : memref<72x512xf32, #tpu.memory_space<vmem>>, vector<8x512xf32>,
    %c0_87 = arith.constant 0 : index
    %c0_88 = arith.constant 0 : index
    %130 = vector.load %arg7[%c0_87, %c0_88] : memref<4x72xf32, #tpu.memory_space<vmem>>, vector<4x72xf32>
    %c0_89 = arith.constant 0 : index
    %c0_90 = arith.constant 0 : index
    %131 = vector.load %arg10[%c0_89, %c0_90] : memref<72x512xf32, #tpu.memory_space<vmem>>, vector<72x512xf32>
    %cst_91 = arith.constant dense<0.000000e+00> : vector<4x512xf32>
    %132 = tpu.matmul %130, %131, %cst_91 {dimension_numbers = #tpu.dot_dimension_numbers<[1], [0], [0], [1], [0, 0, 1, 1], [], []>} : vector<4x72xf32>, vector<72x512xf32>, vector<4x512xf32> -> vector<4x512xf32>
    %c0_92 = arith.constant 0 : index
    %c0_93 = arith.constant 0 : index
    %133 = vector.load %arg8[%c0_92, %c0_93] : memref<4x1xf32, #tpu.memory_space<vmem>>, vector<4x1xf32>
    %134 = vector.broadcast %133 : vector<4x1xf32> to vector<4x512xf32>
    %135 = arith.addf %132, %134 : vector<4x512xf32>
    %cst_94 = arith.constant 0.000000e+00 : f32
    %136 = vector.broadcast %cst_94 : f32 to vector<4x512xf32>
    %137 = arith.maximumf %135, %136 : vector<4x512xf32>
    %138 = vector.extract_strided_slice %137 {offsets = [0, 0], sizes = [4, 256], strides = [1, 1]} : vector<4x512xf32> to vector<4x256xf32>
    %c0_95 = arith.constant 0 : index
    %c0_96 = arith.constant 0 : index
    %c0_97 = arith.constant 0 : index
    %139 = vector.load %arg9[%c0_95, %c0_96, %c0_97] : memref<2x4x256xf32, #tpu.memory_space<vmem>>, vector<1x4x256xf32>
    %140 = vector.shape_cast %139 : vector<1x4x256xf32> to vector<4x256xf32>
    %141 = vector.shape_cast %138 : vector<4x256xf32> to vector<1x4x256xf32>
    tpu.vector_store %arg9[%c0_95, %c0_96, %c0_97], %141 {strides = array<i32>} : memref<2x4x256xf32, #tpu.memory_space<vmem>>, vector<1x4x256xf32>,
    %142 = vector.extract_strided_slice %137 {offsets = [0, 256], sizes = [4, 256], strides = [1, 1]} : vector<4x512xf32> to vector<4x256xf32>
    %c1_98 = arith.constant 1 : index
    %c0_99 = arith.constant 0 : index
    %c0_100 = arith.constant 0 : index
    %143 = vector.load %arg9[%c1_98, %c0_99, %c0_100] : memref<2x4x256xf32, #tpu.memory_space<vmem>>, vector<1x4x256xf32>
    %144 = vector.shape_cast %143 : vector<1x4x256xf32> to vector<4x256xf32>
    %145 = vector.shape_cast %142 : vector<4x256xf32> to vector<1x4x256xf32>
    tpu.vector_store %arg9[%c1_98, %c0_99, %c0_100], %145 {strides = array<i32>} : memref<2x4x256xf32, #tpu.memory_space<vmem>>, vector<1x4x256xf32>,
    return
  }
  func.func @transform_0(%arg0: i32) -> (i32, i32, i32) {
    %c0_i32 = arith.constant 0 : i32
    %c0_i32_0 = arith.constant 0 : i32
    %c0_i32_1 = arith.constant 0 : i32
    return %arg0, %c0_i32, %c0_i32_0 : i32, i32, i32
  }
  func.func @transform_1(%arg0: i32) -> (i32, i32) {
    %c0_i32 = arith.constant 0 : i32
    %c0_i32_0 = arith.constant 0 : i32
    %c0_i32_1 = arith.constant 0 : i32
    return %c0_i32, %c0_i32_0 : i32, i32
  }
  func.func @transform_2(%arg0: i32) -> (i32, i32) {
    %c0_i32 = arith.constant 0 : i32
    %c0_i32_0 = arith.constant 0 : i32
    %c0_i32_1 = arith.constant 0 : i32
    return %c0_i32, %c0_i32_0 : i32, i32
  }
  func.func @transform_3(%arg0: i32) -> (i32, i32) {
    %c0_i32 = arith.constant 0 : i32
    %c0_i32_0 = arith.constant 0 : i32
    %c0_i32_1 = arith.constant 0 : i32
    return %c0_i32, %c0_i32_0 : i32, i32
  }
  func.func @transform_4(%arg0: i32) -> (i32, i32) {
    %c0_i32 = arith.constant 0 : i32
    %c0_i32_0 = arith.constant 0 : i32
    %c0_i32_1 = arith.constant 0 : i32
    return %c0_i32, %c0_i32_0 : i32, i32
  }
  func.func @transform_5(%arg0: i32) -> (i32, i32) {
    %c0_i32 = arith.constant 0 : i32
    %c0_i32_0 = arith.constant 0 : i32
    %c0_i32_1 = arith.constant 0 : i32
    return %c0_i32, %c0_i32_0 : i32, i32
  }
  func.func @transform_6(%arg0: i32) -> (i32, i32) {
    %c0_i32 = arith.constant 0 : i32
    %c0_i32_0 = arith.constant 0 : i32
    %c0_i32_1 = arith.constant 0 : i32
    return %c0_i32, %c0_i32_0 : i32, i32
  }
  func.func @transform_7(%arg0: i32) -> (i32, i32) {
    %c0_i32 = arith.constant 0 : i32
    %c0_i32_0 = arith.constant 0 : i32
    %c0_i32_1 = arith.constant 0 : i32
    return %c0_i32, %c0_i32_0 : i32, i32
  }
  func.func @transform_8(%arg0: i32) -> (i32, i32, i32) {
    %c0_i32 = arith.constant 0 : i32
    %c0_i32_0 = arith.constant 0 : i32
    %c0_i32_1 = arith.constant 0 : i32
    return %arg0, %c0_i32, %c0_i32_0 : i32, i32, i32
  }
}

</mosaic_0001>

<llo_original>
// kernel: triple_conv_forward.1
$region0: #{triple_conv_forward.1}
  #allocation0 [shape = 'u32[]', space=smem, size = 0x4, offset = 0x4, fixed_abs, tag = 'smem constant byte address 0x4 - core index']
  #allocation1 [shape = 'u32[72,128]{1,0:T(1,128)}', space=vmem, size = 0x9000, scoped, tag = 'internal scratch']
  #allocation2 [shape = 'f32[72,512]{1,0:T(8,128)}', space=vmem, size = 0x24000, scoped, tag = 'scratch operand']
  %s0 = inlined_call_operand.vmem [shape: f32[2,4,256], index: 0, kind: input, shape index: {}]
  %s1 = inlined_call_operand.vmem [shape: s32[2,256], index: 1, kind: input, shape index: {}]
  %s2 = inlined_call_operand.vmem [shape: f32[8,72], index: 2, kind: input, shape index: {}]
  %s3 = inlined_call_operand.vmem [shape: f32[8,1], index: 3, kind: input, shape index: {}]
  %s4 = inlined_call_operand.vmem [shape: f32[8,72], index: 4, kind: input, shape index: {}]
  %s5 = inlined_call_operand.vmem [shape: f32[8,1], index: 5, kind: input, shape index: {}]
  %s6 = inlined_call_operand.vmem [shape: f32[4,72], index: 6, kind: input, shape index: {}]
  %s7 = inlined_call_operand.vmem [shape: f32[4,1], index: 7, kind: input, shape index: {}]
  %s8 = inlined_call_operand.vmem [shape: f32[2,4,256], index: 8, kind: output, shape index: {}]
  %s9 = sld [smem:[#allocation0]]
  $region42: #{triple_conv_forward.1} parent=0
    _
  %s11 = ssub.s32 1, %s9
  %s12 = scalar_select 0, %s11, %s9
  // Predicated region
  $region2: #{triple_conv_forward.1} parent=0 // pred_check
    _
  $region3: #{triple_conv_forward.1} parent=0 // pred_check_branch
    %14 = sbr.rel (0) target = $region5
  $region4: #{triple_conv_forward.1} parent=0 // pred_region
    _
  $region5: #{triple_conv_forward.1} parent=0 // pred_fallthru
    _
  // Predicated region
  $region6: #{triple_conv_forward.1} parent=0 // pred_check
    _
  $region7: #{triple_conv_forward.1} parent=0 // pred_check_branch
    %16 = sbr.rel (0) target = $region9
  $region8: #{triple_conv_forward.1} parent=0 // pred_region
    _
  $region9: #{triple_conv_forward.1} parent=0 // pred_fallthru
    _
  // Predicated region
  $region10: #{triple_conv_forward.1} parent=0 // pred_check
    _
  $region11: #{triple_conv_forward.1} parent=0 // pred_check_branch
    %18 = sbr.rel (0) target = $region13
  $region12: #{triple_conv_forward.1} parent=0 // pred_region
    _
  $region13: #{triple_conv_forward.1} parent=0 // pred_fallthru
    _
  // Predicated region
  $region14: #{triple_conv_forward.1} parent=0 // pred_check
    _
  $region15: #{triple_conv_forward.1} parent=0 // pred_check_branch
    %20 = sbr.rel (0) target = $region17
  $region16: #{triple_conv_forward.1} parent=0 // pred_region
    _
  $region17: #{triple_conv_forward.1} parent=0 // pred_fallthru
    _
  // Predicated region
  $region18: #{triple_conv_forward.1} parent=0 // pred_check
    _
  $region19: #{triple_conv_forward.1} parent=0 // pred_check_branch
    %22 = sbr.rel (0) target = $region21
  $region20: #{triple_conv_forward.1} parent=0 // pred_region
    _
  $region21: #{triple_conv_forward.1} parent=0 // pred_fallthru
    _
  // Predicated region
  $region22: #{triple_conv_forward.1} parent=0 // pred_check
    _
  $region23: #{triple_conv_forward.1} parent=0 // pred_check_branch
    %24 = sbr.rel (0) target = $region25
  $region24: #{triple_conv_forward.1} parent=0 // pred_region
    _
  $region25: #{triple_conv_forward.1} parent=0 // pred_fallthru
    _
  // Predicated region
  $region26: #{triple_conv_forward.1} parent=0 // pred_check
    _
  $region27: #{triple_conv_forward.1} parent=0 // pred_check_branch
    %26 = sbr.rel (0) target = $region29
  $region28: #{triple_conv_forward.1} parent=0 // pred_region
    _
  $region29: #{triple_conv_forward.1} parent=0 // pred_fallthru
    _
  // Predicated region
  $region30: #{triple_conv_forward.1} parent=0 // pred_check
    _
  $region31: #{triple_conv_forward.1} parent=0 // pred_check_branch
    %28 = sbr.rel (0) target = $region33
  $region32: #{triple_conv_forward.1} parent=0 // pred_region
    _
  $region33: #{triple_conv_forward.1} parent=0 // pred_fallthru
    _
  %v29 = vld [vmem:[%s0] sm:$0xff]
  %s30 = scalar_lea.vmem %s0, 8
  %v31 = vld [vmem:[%s30] sm:$0xff]
  %33 = vst [vmem:[#allocation1] ss:$2 sm:$0xff] %v29
  %v34 = vld.sshfl [vmem:[#allocation1] sm:$0xff pattern:$0x75316420]
  %v35 = vld.sshfl [vmem:[#allocation1 + $0x8] sm:$0xff pattern:$0x75316420]
  %39 = vst [vmem:[#allocation1] ss:$2 sm:$0xff] %v31
  %v40 = vld.sshfl [vmem:[#allocation1] sm:$0xff pattern:$0x75316420]
  %v41 = vld.sshfl [vmem:[#allocation1 + $0x8] sm:$0xff pattern:$0x75316420]
  %v44 = vld [vmem:[%s1] sm:$0xf]
  %45 = vst [vmem:[#allocation1] ss:$4 sm:$0xff] %v44
  %v46 = vld.sshfl [vmem:[#allocation1] sm:$0xff pattern:$0x73625140]
  %v47 = vld.sshfl [vmem:[#allocation1 + $0x8] sm:$0xff pattern:$0x73625140]
  %48 = vst [vmem:[#allocation1] ss:$4 sm:$0xff] %v44
  %v49 = vld.sshfl [vmem:[#allocation1] sm:$0xff pattern:$0x73625140]
  %v50 = vld.sshfl [vmem:[#allocation1 + $0x8] sm:$0xff pattern:$0x73625140]
  %vm51 = vcmp.eq.s32.totalorder %v46, 0
  %vm52 = vcmp.eq.s32.totalorder %v47, 0
  %vm53 = vcmp.eq.s32.totalorder %v49, 0
  %vm54 = vcmp.eq.s32.totalorder %v50, 0
  %v55 = vsel %vm51, 1, 0
  %v56 = vsel %vm52, 1, 0
  %v57 = vsel %vm53, 1, 0
  %v58 = vsel %vm54, 1, 0
  %v59 = vperm.slane %v55, 0
  %v60 = vperm.slane %v56, 0
  %v61 = vperm.slane %v57, 0
  %v62 = vperm.slane %v58, 0
  %vm63 = vcmp.eq.s32.totalorder %v59, 1
  %vm64 = vcmp.eq.s32.totalorder %v60, 1
  %vm65 = vcmp.eq.s32.totalorder %v61, 1
  %vm66 = vcmp.eq.s32.totalorder %v62, 1
  %vm67 = vcmp.eq.s32.totalorder %v46, 15
  %vm68 = vcmp.eq.s32.totalorder %v47, 15
  %vm69 = vcmp.eq.s32.totalorder %v49, 15
  %vm70 = vcmp.eq.s32.totalorder %v50, 15
  %v71 = vsel %vm67, 1, 0
  %v72 = vsel %vm68, 1, 0
  %v73 = vsel %vm69, 1, 0
  %v74 = vsel %vm70, 1, 0
  %v75 = vperm.slane %v71, 0
  %v76 = vperm.slane %v72, 0
  %v77 = vperm.slane %v73, 0
  %v78 = vperm.slane %v74, 0
  %vm79 = vcmp.eq.s32.totalorder %v75, 1
  %vm80 = vcmp.eq.s32.totalorder %v76, 1
  %vm81 = vcmp.eq.s32.totalorder %v77, 1
  %vm82 = vcmp.eq.s32.totalorder %v78, 1
  %v83 = vperm.slane %v55, 1
  %v84 = vperm.slane %v56, 1
  %v85 = vperm.slane %v57, 1
  %v86 = vperm.slane %v58, 1
  %vm87 = vcmp.eq.s32.totalorder %v83, 1
  %vm88 = vcmp.eq.s32.totalorder %v84, 1
  %vm89 = vcmp.eq.s32.totalorder %v85, 1
  %vm90 = vcmp.eq.s32.totalorder %v86, 1
  %v91 = vperm.slane %v71, 1
  %v92 = vperm.slane %v72, 1
  %v93 = vperm.slane %v73, 1
  %v94 = vperm.slane %v74, 1
  %vm95 = vcmp.eq.s32.totalorder %v91, 1
  %vm96 = vcmp.eq.s32.totalorder %v92, 1
  %vm97 = vcmp.eq.s32.totalorder %v93, 1
  %vm98 = vcmp.eq.s32.totalorder %v94, 1
  %vm99 = vcmask 1043456
  %v100 = vsel %vm99, %v34, 0.0
  %v101 = vsel %vm99, %v35, 0.0
  %v102 = vsel %vm99, %v40, 0.0
  %v103 = vsel %vm99, %v41, 0.0
  %104 = vrot.lane.b32.xlu0 %v100, 17
  %v105 = vpop.permute.xlu0 %104
  %106 = vrot.lane.b32.xlu0 %v101, 17
  %v107 = vpop.permute.xlu0 %106
  %108 = vrot.lane.b32.xlu0 %v102, 17
  %v109 = vpop.permute.xlu0 %108
  %110 = vrot.lane.b32.xlu0 %v103, 17
  %v111 = vpop.permute.xlu0 %110
  %v112 = vlaneseq
  %v113 = vand.u32 %v112, 127
  %vm114 = vcmp.lt.s32.totalorder %v113, 17
  %v115 = vsel %vm114, %v109, %v111
  %v116 = vsel %vm114, %v107, %v109
  %v117 = vsel %vm114, %v105, %v107
  %v118 = vsel %vm114, %v111, %v105
  %119 = vrot.lane.b32.xlu0 %v100, 16
  %v120 = vpop.permute.xlu0 %119
  %121 = vrot.lane.b32.xlu0 %v101, 16
  %v122 = vpop.permute.xlu0 %121
  %123 = vrot.lane.b32.xlu0 %v102, 16
  %v124 = vpop.permute.xlu0 %123
  %125 = vrot.lane.b32.xlu0 %v103, 16
  %v126 = vpop.permute.xlu0 %125
  %vm127 = vcmp.lt.s32.totalorder %v113, 16
  %v128 = vsel %vm127, %v124, %v126
  %v129 = vsel %vm127, %v122, %v124
  %v130 = vsel %vm127, %v120, %v122
  %v131 = vsel %vm127, %v126, %v120
  %132 = vrot.lane.b32.xlu0 %v100, 15
  %v133 = vpop.permute.xlu0 %132
  %134 = vrot.lane.b32.xlu0 %v101, 15
  %v135 = vpop.permute.xlu0 %134
  %136 = vrot.lane.b32.xlu0 %v102, 15
  %v137 = vpop.permute.xlu0 %136
  %138 = vrot.lane.b32.xlu0 %v103, 15
  %v139 = vpop.permute.xlu0 %138
  %vm140 = vcmp.lt.s32.totalorder %v113, 15
  %v141 = vsel %vm140, %v137, %v139
  %v142 = vsel %vm140, %v135, %v137
  %v143 = vsel %vm140, %v133, %v135
  %v144 = vsel %vm140, %v139, %v133
  %145 = vrot.lane.b32.xlu0 %v100, 1
  %v146 = vpop.permute.xlu0 %145
  %147 = vrot.lane.b32.xlu0 %v101, 1
  %v148 = vpop.permute.xlu0 %147
  %149 = vrot.lane.b32.xlu0 %v102, 1
  %v150 = vpop.permute.xlu0 %149
  %151 = vrot.lane.b32.xlu0 %v103, 1
  %v152 = vpop.permute.xlu0 %151
  %vm153 = vcmp.lt.s32.totalorder %v113, 1
  %v154 = vsel %vm153, %v150, %v152
  %v155 = vsel %vm153, %v148, %v150
  %v156 = vsel %vm153, %v146, %v148
  %v157 = vsel %vm153, %v152, %v146
  %158 = vrot.lane.b32.xlu0 %v100, 127
  %v159 = vpop.permute.xlu0 %158
  %160 = vrot.lane.b32.xlu0 %v101, 127
  %v161 = vpop.permute.xlu0 %160
  %162 = vrot.lane.b32.xlu0 %v102, 127
  %v163 = vpop.permute.xlu0 %162
  %164 = vrot.lane.b32.xlu0 %v103, 127
  %v165 = vpop.permute.xlu0 %164
  %vm166 = vcmp.lt.s32.totalorder %v113, 127
  %v167 = vsel %vm166, %v163, %v165
  %v168 = vsel %vm166, %v161, %v163
  %v169 = vsel %vm166, %v159, %v161
  %v170 = vsel %vm166, %v165, %v159
  %171 = vrot.lane.b32.xlu0 %v100, 113
  %v172 = vpop.permute.xlu0 %171
  %173 = vrot.lane.b32.xlu0 %v101, 113
  %v174 = vpop.permute.xlu0 %173
  %175 = vrot.lane.b32.xlu0 %v102, 113
  %v176 = vpop.permute.xlu0 %175
  %177 = vrot.lane.b32.xlu0 %v103, 113
  %v178 = vpop.permute.xlu0 %177
  %vm179 = vcmp.lt.s32.totalorder %v113, 113
  %v180 = vsel %vm179, %v176, %v178
  %v181 = vsel %vm179, %v174, %v176
  %v182 = vsel %vm179, %v172, %v174
  %v183 = vsel %vm179, %v178, %v172
  %184 = vrot.lane.b32.xlu0 %v100, 112
  %v185 = vpop.permute.xlu0 %184
  %186 = vrot.lane.b32.xlu0 %v101, 112
  %v187 = vpop.permute.xlu0 %186
  %188 = vrot.lane.b32.xlu0 %v102, 112
  %v189 = vpop.permute.xlu0 %188
  %190 = vrot.lane.b32.xlu0 %v103, 112
  %v191 = vpop.permute.xlu0 %190
  %vm192 = vcmp.lt.s32.totalorder %v113, 112
  %v193 = vsel %vm192, %v189, %v191
  %v194 = vsel %vm192, %v187, %v189
  %v195 = vsel %vm192, %v185, %v187
  %v196 = vsel %vm192, %v191, %v185
  %197 = vrot.lane.b32.xlu0 %v100, 111
  %v198 = vpop.permute.xlu0 %197
  %199 = vrot.lane.b32.xlu0 %v101, 111
  %v200 = vpop.permute.xlu0 %199
  %201 = vrot.lane.b32.xlu0 %v102, 111
  %v202 = vpop.permute.xlu0 %201
  %203 = vrot.lane.b32.xlu0 %v103, 111
  %v204 = vpop.permute.xlu0 %203
  %vm205 = vcmp.lt.s32.totalorder %v113, 111
  %v206 = vsel %vm205, %v202, %v204
  %v207 = vsel %vm205, %v200, %v202
  %v208 = vsel %vm205, %v198, %v200
  %v209 = vsel %vm205, %v204, %v198
  %v210 = vsel %vm63, %v144, %v118
  %v211 = vsel %vm64, %v143, %v117
  %v212 = vsel %vm65, %v142, %v116
  %v213 = vsel %vm66, %v141, %v115
  %v214 = vsel %vm63, %v169, %v157
  %v215 = vsel %vm64, %v168, %v156
  %v216 = vsel %vm65, %v167, %v155
  %v217 = vsel %vm66, %v170, %v154
  %v218 = vsel %vm63, %v208, %v182
  %v219 = vsel %vm64, %v207, %v181
  %v220 = vsel %vm65, %v206, %v180
  %v221 = vsel %vm66, %v209, %v183
  %v222 = vsel %vm79, %v118, %v144
  %v223 = vsel %vm80, %v117, %v143
  %v224 = vsel %vm81, %v116, %v142
  %v225 = vsel %vm82, %v115, %v141
  %v226 = vsel %vm79, %v157, %v169
  %v227 = vsel %vm80, %v156, %v168
  %v228 = vsel %vm81, %v155, %v167
  %v229 = vsel %vm82, %v154, %v170
  %v230 = vsel %vm79, %v182, %v208
  %v231 = vsel %vm80, %v181, %v207
  %v232 = vsel %vm81, %v180, %v206
  %v233 = vsel %vm82, %v183, %v209
  %v234 = vsel %vm87, %v218, %v210
  %v235 = vsel %vm88, %v219, %v211
  %v236 = vsel %vm89, %v220, %v212
  %v237 = vsel %vm90, %v221, %v213
  %238 = vst [vmem:[#allocation2] sm:$0xff] %v234
  %239 = vst [vmem:[#allocation2 + $0x8] sm:$0xff] %v235
  %240 = vst [vmem:[#allocation2 + $0x10] sm:$0xff] %v236
  %241 = vst [vmem:[#allocation2 + $0x18] sm:$0xff] %v237
  %v242 = vsel %vm87, %v195, %v131
  %v243 = vsel %vm88, %v194, %v130
  %v244 = vsel %vm89, %v193, %v129
  %v245 = vsel %vm90, %v196, %v128
  %246 = vst [vmem:[#allocation2 + $0x20] sm:$0xff] %v242
  %247 = vst [vmem:[#allocation2 + $0x28] sm:$0xff] %v243
  %248 = vst [vmem:[#allocation2 + $0x30] sm:$0xff] %v244
  %249 = vst [vmem:[#allocation2 + $0x38] sm:$0xff] %v245
  %v250 = vsel %vm87, %v230, %v222
  %v251 = vsel %vm88, %v231, %v223
  %v252 = vsel %vm89, %v232, %v224
  %v253 = vsel %vm90, %v233, %v225
  %254 = vst [vmem:[#allocation2 + $0x40] sm:$0xff] %v250
  %255 = vst [vmem:[#allocation2 + $0x48] sm:$0xff] %v251
  %256 = vst [vmem:[#allocation2 + $0x50] sm:$0xff] %v252
  %257 = vst [vmem:[#allocation2 + $0x58] sm:$0xff] %v253
  %258 = vst [vmem:[#allocation2 + $0x60] sm:$0xff] %v214
  %259 = vst [vmem:[#allocation2 + $0x68] sm:$0xff] %v215
  %260 = vst [vmem:[#allocation2 + $0x70] sm:$0xff] %v216
  %261 = vst [vmem:[#allocation2 + $0x78] sm:$0xff] %v217
  %262 = vst [vmem:[#allocation2 + $0x80] sm:$0xff] %v100
  %263 = vst [vmem:[#allocation2 + $0x88] sm:$0xff] %v101
  %264 = vst [vmem:[#allocation2 + $0x90] sm:$0xff] %v102
  %265 = vst [vmem:[#allocation2 + $0x98] sm:$0xff] %v103
  %266 = vst [vmem:[#allocation2 + $0xa0] sm:$0xff] %v226
  %267 = vst [vmem:[#allocation2 + $0xa8] sm:$0xff] %v227
  %268 = vst [vmem:[#allocation2 + $0xb0] sm:$0xff] %v228
  %269 = vst [vmem:[#allocation2 + $0xb8] sm:$0xff] %v229
  %v270 = vsel %vm95, %v210, %v218
  %v271 = vsel %vm96, %v211, %v219
  %v272 = vsel %vm97, %v212, %v220
  %v273 = vsel %vm98, %v213, %v221
  %274 = vst [vmem:[#allocation2 + $0xc0] sm:$0xff] %v270
  %275 = vst [vmem:[#allocation2 + $0xc8] sm:$0xff] %v271
  %276 = vst [vmem:[#allocation2 + $0xd0] sm:$0xff] %v272
  %277 = vst [vmem:[#allocation2 + $0xd8] sm:$0xff] %v273
  %v278 = vsel %vm95, %v131, %v195
  %v279 = vsel %vm96, %v130, %v194
  %v280 = vsel %vm97, %v129, %v193
  %v281 = vsel %vm98, %v128, %v196
  %282 = vst [vmem:[#allocation2 + $0xe0] sm:$0xff] %v278
  %283 = vst [vmem:[#allocation2 + $0xe8] sm:$0xff] %v279
  %284 = vst [vmem:[#allocation2 + $0xf0] sm:$0xff] %v280
  %285 = vst [vmem:[#allocation2 + $0xf8] sm:$0xff] %v281
  %v286 = vsel %vm95, %v222, %v230
  %v287 = vsel %vm96, %v223, %v231
  %v288 = vsel %vm97, %v224, %v232
  %v289 = vsel %vm98, %v225, %v233
  %290 = vst [vmem:[#allocation2 + $0x100] sm:$0xff] %v286
  %291 = vst [vmem:[#allocation2 + $0x108] sm:$0xff] %v287
  %292 = vst [vmem:[#allocation2 + $0x110] sm:$0xff] %v288
  %293 = vst [vmem:[#allocation2 + $0x118] sm:$0xff] %v289
  %v294 = vld [vmem:[%s2] sm:$0xff]
  %v295 = vld [vmem:[#allocation2] sm:$0xff]
  %v296 = vld [vmem:[#allocation2 + $0x8] sm:$0xff]
  %v297 = vld [vmem:[#allocation2 + $0x10] sm:$0xff]
  %v298 = vld [vmem:[#allocation2 + $0x18] sm:$0xff]
  %v299 = vld [vmem:[#allocation2 + $0x20] sm:$0xff]
  %v300 = vld [vmem:[#allocation2 + $0x28] sm:$0xff]
  %v301 = vld [vmem:[#allocation2 + $0x30] sm:$0xff]
  %v302 = vld [vmem:[#allocation2 + $0x38] sm:$0xff]
  %v303 = vld [vmem:[#allocation2 + $0x40] sm:$0xff]
  %v304 = vld [vmem:[#allocation2 + $0x48] sm:$0xff]
  %v305 = vld [vmem:[#allocation2 + $0x50] sm:$0xff]
  %v306 = vld [vmem:[#allocation2 + $0x58] sm:$0xff]
  %v307 = vld [vmem:[#allocation2 + $0x60] sm:$0xff]
  %v308 = vld [vmem:[#allocation2 + $0x68] sm:$0xff]
  %v309 = vld [vmem:[#allocation2 + $0x70] sm:$0xff]
  %v310 = vld [vmem:[#allocation2 + $0x78] sm:$0xff]
  %v311 = vld [vmem:[#allocation2 + $0x80] sm:$0xff]
  %v312 = vld [vmem:[#allocation2 + $0x88] sm:$0xff]
  %v313 = vld [vmem:[#allocation2 + $0x90] sm:$0xff]
  %v314 = vld [vmem:[#allocation2 + $0x98] sm:$0xff]
  %v315 = vld [vmem:[#allocation2 + $0xa0] sm:$0xff]
  %v316 = vld [vmem:[#allocation2 + $0xa8] sm:$0xff]
  %v317 = vld [vmem:[#allocation2 + $0xb0] sm:$0xff]
  %v318 = vld [vmem:[#allocation2 + $0xb8] sm:$0xff]
  %v319 = vld [vmem:[#allocation2 + $0xc0] sm:$0xff]
  %v320 = vld [vmem:[#allocation2 + $0xc8] sm:$0xff]
  %v321 = vld [vmem:[#allocation2 + $0xd0] sm:$0xff]
  %v322 = vld [vmem:[#allocation2 + $0xd8] sm:$0xff]
  %v323 = vld [vmem:[#allocation2 + $0xe0] sm:$0xff]
  %v324 = vld [vmem:[#allocation2 + $0xe8] sm:$0xff]
  %v325 = vld [vmem:[#allocation2 + $0xf0] sm:$0xff]
  %v326 = vld [vmem:[#allocation2 + $0xf8] sm:$0xff]
  %v327 = vld [vmem:[#allocation2 + $0x100] sm:$0xff]
  %v328 = vld [vmem:[#allocation2 + $0x108] sm:$0xff]
  %v329 = vld [vmem:[#allocation2 + $0x110] sm:$0xff]
  %v330 = vld [vmem:[#allocation2 + $0x118] sm:$0xff]
  %v331 = vld [vmem:[%s3] sm:$0xff]
  %333 = vset.pattern.permute.xlu0 0
  %334 = vperm.xlu0 %333, %v331
  %v335 = vpop.permute.xlu0 %334
  %vm337 = vcmask 588800
  %v339 = vsel %vm337, %v294, 0
  %341 = vmatpush.msra.mxu0 0.0
  %342 = vmatpush.msra.mxu0 0.0
  %343 = vmatpush.msra.mxu0 0.0
  %344 = vmatpush.msra.mxu0 0.0
  %345 = vmatpush.msra.mxu0 0.0
  %346 = vmatpush.msra.mxu0 0.0
  %347 = vmatpush.msra.mxu0 0.0
  %348 = vmatpush.msra.mxu0 %v327
  %349 = vmatpush.msra.mxu0 %v323
  %350 = vmatpush.msra.mxu0 %v319
  %351 = vmatpush.msra.mxu0 %v315
  %352 = vmatpush.msra.mxu0 %v311
  %353 = vmatpush.msra.mxu0 %v307
  %354 = vmatpush.msra.mxu0 %v303
  %355 = vmatpush.msra.mxu0 %v299
  %356 = vmatpush.msra.mxu0 %v295
  %357 = vmatmul.f32.gmra.mxu0 %v339
  %v358 = vpop.f32.mrf.mxu0
  %v359 = vadd.f32 %v335, %v358
  %360 = vdwg.mxu0
  %361 = vmatpush.msra.mxu0 0.0
  %362 = vmatpush.msra.mxu0 0.0
  %363 = vmatpush.msra.mxu0 0.0
  %364 = vmatpush.msra.mxu0 0.0
  %365 = vmatpush.msra.mxu0 0.0
  %366 = vmatpush.msra.mxu0 0.0
  %367 = vmatpush.msra.mxu0 0.0
  %368 = vmatpush.msra.mxu0 %v328
  %369 = vmatpush.msra.mxu0 %v324
  %370 = vmatpush.msra.mxu0 %v320
  %371 = vmatpush.msra.mxu0 %v316
  %372 = vmatpush.msra.mxu0 %v312
  %373 = vmatpush.msra.mxu0 %v308
  %374 = vmatpush.msra.mxu0 %v304
  %375 = vmatpush.msra.mxu0 %v300
  %376 = vmatpush.msra.mxu0 %v296
  %377 = vmatmul.f32.gmra.mxu0 %v339
  %v378 = vpop.f32.mrf.mxu0
  %v379 = vadd.f32 %v335, %v378
  %380 = vdwg.mxu0
  %381 = vmatpush.msra.mxu0 0.0
  %382 = vmatpush.msra.mxu0 0.0
  %383 = vmatpush.msra.mxu0 0.0
  %384 = vmatpush.msra.mxu0 0.0
  %385 = vmatpush.msra.mxu0 0.0
  %386 = vmatpush.msra.mxu0 0.0
  %387 = vmatpush.msra.mxu0 0.0
  %388 = vmatpush.msra.mxu0 %v329
  %389 = vmatpush.msra.mxu0 %v325
  %390 = vmatpush.msra.mxu0 %v321
  %391 = vmatpush.msra.mxu0 %v317
  %392 = vmatpush.msra.mxu0 %v313
  %393 = vmatpush.msra.mxu0 %v309
  %394 = vmatpush.msra.mxu0 %v305
  %395 = vmatpush.msra.mxu0 %v301
  %396 = vmatpush.msra.mxu0 %v297
  %397 = vmatmul.f32.gmra.mxu0 %v339
  %v398 = vpop.f32.mrf.mxu0
  %v399 = vadd.f32 %v335, %v398
  %400 = vdwg.mxu0
  %401 = vmatpush.msra.mxu0 0.0
  %402 = vmatpush.msra.mxu0 0.0
  %403 = vmatpush.msra.mxu0 0.0
  %404 = vmatpush.msra.mxu0 0.0
  %405 = vmatpush.msra.mxu0 0.0
  %406 = vmatpush.msra.mxu0 0.0
  %407 = vmatpush.msra.mxu0 0.0
  %408 = vmatpush.msra.mxu0 %v330
  %409 = vmatpush.msra.mxu0 %v326
  %410 = vmatpush.msra.mxu0 %v322
  %411 = vmatpush.msra.mxu0 %v318
  %412 = vmatpush.msra.mxu0 %v314
  %413 = vmatpush.msra.mxu0 %v310
  %414 = vmatpush.msra.mxu0 %v306
  %415 = vmatpush.msra.mxu0 %v302
  %416 = vmatpush.msra.mxu0 %v298
  %417 = vmatmul.f32.gmra.mxu0 %v339
  %v418 = vpop.f32.mrf.mxu0
  %v419 = vadd.f32 %v335, %v418
  %420 = vdwg.mxu0
  %v421 = vmax.f32 %v359, 0.0
  %v422 = vmax.f32 %v379, 0.0
  %v423 = vmax.f32 %v399, 0.0
  %v424 = vmax.f32 %v419, 0.0
  %425 = vrot.lane.b32.xlu0 %v421, 17
  %v426 = vpop.permute.xlu0 %425
  %427 = vrot.lane.b32.xlu0 %v422, 17
  %v428 = vpop.permute.xlu0 %427
  %429 = vrot.lane.b32.xlu0 %v423, 17
  %v430 = vpop.permute.xlu0 %429
  %431 = vrot.lane.b32.xlu0 %v424, 17
  %v432 = vpop.permute.xlu0 %431
  %v433 = vsel %vm114, %v430, %v432
  %v434 = vsel %vm114, %v428, %v430
  %v435 = vsel %vm114, %v426, %v428
  %v436 = vsel %vm114, %v432, %v426
  %437 = vrot.lane.b32.xlu0 %v421, 16
  %v438 = vpop.permute.xlu0 %437
  %439 = vrot.lane.b32.xlu0 %v422, 16
  %v440 = vpop.permute.xlu0 %439
  %441 = vrot.lane.b32.xlu0 %v423, 16
  %v442 = vpop.permute.xlu0 %441
  %443 = vrot.lane.b32.xlu0 %v424, 16
  %v444 = vpop.permute.xlu0 %443
  %v445 = vsel %vm127, %v442, %v444
  %v446 = vsel %vm127, %v440, %v442
  %v447 = vsel %vm127, %v438, %v440
  %v448 = vsel %vm127, %v444, %v438
  %449 = vrot.lane.b32.xlu0 %v421, 15
  %v450 = vpop.permute.xlu0 %449
  %451 = vrot.lane.b32.xlu0 %v422, 15
  %v452 = vpop.permute.xlu0 %451
  %453 = vrot.lane.b32.xlu0 %v423, 15
  %v454 = vpop.permute.xlu0 %453
  %455 = vrot.lane.b32.xlu0 %v424, 15
  %v456 = vpop.permute.xlu0 %455
  %v457 = vsel %vm140, %v454, %v456
  %v458 = vsel %vm140, %v452, %v454
  %v459 = vsel %vm140, %v450, %v452
  %v460 = vsel %vm140, %v456, %v450
  %461 = vrot.lane.b32.xlu0 %v421, 1
  %v462 = vpop.permute.xlu0 %461
  %463 = vrot.lane.b32.xlu0 %v422, 1
  %v464 = vpop.permute.xlu0 %463
  %465 = vrot.lane.b32.xlu0 %v423, 1
  %v466 = vpop.permute.xlu0 %465
  %467 = vrot.lane.b32.xlu0 %v424, 1
  %v468 = vpop.permute.xlu0 %467
  %v469 = vsel %vm153, %v466, %v468
  %v470 = vsel %vm153, %v464, %v466
  %v471 = vsel %vm153, %v462, %v464
  %v472 = vsel %vm153, %v468, %v462
  %473 = vrot.lane.b32.xlu0 %v421, 127
  %v474 = vpop.permute.xlu0 %473
  %475 = vrot.lane.b32.xlu0 %v422, 127
  %v476 = vpop.permute.xlu0 %475
  %477 = vrot.lane.b32.xlu0 %v423, 127
  %v478 = vpop.permute.xlu0 %477
  %479 = vrot.lane.b32.xlu0 %v424, 127
  %v480 = vpop.permute.xlu0 %479
  %v481 = vsel %vm166, %v478, %v480
  %v482 = vsel %vm166, %v476, %v478
  %v483 = vsel %vm166, %v474, %v476
  %v484 = vsel %vm166, %v480, %v474
  %485 = vrot.lane.b32.xlu0 %v421, 113
  %v486 = vpop.permute.xlu0 %485
  %487 = vrot.lane.b32.xlu0 %v422, 113
  %v488 = vpop.permute.xlu0 %487
  %489 = vrot.lane.b32.xlu0 %v423, 113
  %v490 = vpop.permute.xlu0 %489
  %491 = vrot.lane.b32.xlu0 %v424, 113
  %v492 = vpop.permute.xlu0 %491
  %v493 = vsel %vm179, %v490, %v492
  %v494 = vsel %vm179, %v488, %v490
  %v495 = vsel %vm179, %v486, %v488
  %v496 = vsel %vm179, %v492, %v486
  %497 = vrot.lane.b32.xlu0 %v421, 112
  %v498 = vpop.permute.xlu0 %497
  %499 = vrot.lane.b32.xlu0 %v422, 112
  %v500 = vpop.permute.xlu0 %499
  %501 = vrot.lane.b32.xlu0 %v423, 112
  %v502 = vpop.permute.xlu0 %501
  %503 = vrot.lane.b32.xlu0 %v424, 112
  %v504 = vpop.permute.xlu0 %503
  %v505 = vsel %vm192, %v502, %v504
  %v506 = vsel %vm192, %v500, %v502
  %v507 = vsel %vm192, %v498, %v500
  %v508 = vsel %vm192, %v504, %v498
  %509 = vrot.lane.b32.xlu0 %v421, 111
  %v510 = vpop.permute.xlu0 %509
  %511 = vrot.lane.b32.xlu0 %v422, 111
  %v512 = vpop.permute.xlu0 %511
  %513 = vrot.lane.b32.xlu0 %v423, 111
  %v514 = vpop.permute.xlu0 %513
  %515 = vrot.lane.b32.xlu0 %v424, 111
  %v516 = vpop.permute.xlu0 %515
  %v517 = vsel %vm205, %v514, %v516
  %v518 = vsel %vm205, %v512, %v514
  %v519 = vsel %vm205, %v510, %v512
  %v520 = vsel %vm205, %v516, %v510
  %v521 = vsel %vm63, %v460, %v436
  %v522 = vsel %vm64, %v459, %v435
  %v523 = vsel %vm65, %v458, %v434
  %v524 = vsel %vm66, %v457, %v433
  %v525 = vsel %vm63, %v483, %v472
  %v526 = vsel %vm64, %v482, %v471
  %v527 = vsel %vm65, %v481, %v470
  %v528 = vsel %vm66, %v484, %v469
  %v529 = vsel %vm63, %v519, %v495
  %v530 = vsel %vm64, %v518, %v494
  %v531 = vsel %vm65, %v517, %v493
  %v532 = vsel %vm66, %v520, %v496
  %v533 = vsel %vm79, %v436, %v460
  %v534 = vsel %vm80, %v435, %v459
  %v535 = vsel %vm81, %v434, %v458
  %v536 = vsel %vm82, %v433, %v457
  %v537 = vsel %vm79, %v472, %v483
  %v538 = vsel %vm80, %v471, %v482
  %v539 = vsel %vm81, %v470, %v481
  %v540 = vsel %vm82, %v469, %v484
  %v541 = vsel %vm79, %v495, %v519
  %v542 = vsel %vm80, %v494, %v518
  %v543 = vsel %vm81, %v493, %v517
  %v544 = vsel %vm82, %v496, %v520
  %v545 = vsel %vm87, %v529, %v521
  %v546 = vsel %vm88, %v530, %v522
  %v547 = vsel %vm89, %v531, %v523
  %v548 = vsel %vm90, %v532, %v524
  %549 = vst [vmem:[#allocation2] sm:$0xff] %v545
  %550 = vst [vmem:[#allocation2 + $0x8] sm:$0xff] %v546
  %551 = vst [vmem:[#allocation2 + $0x10] sm:$0xff] %v547
  %552 = vst [vmem:[#allocation2 + $0x18] sm:$0xff] %v548
  %v553 = vsel %vm87, %v507, %v448
  %v554 = vsel %vm88, %v506, %v447
  %v555 = vsel %vm89, %v505, %v446
  %v556 = vsel %vm90, %v508, %v445
  %557 = vst [vmem:[#allocation2 + $0x20] sm:$0xff] %v553
  %558 = vst [vmem:[#allocation2 + $0x28] sm:$0xff] %v554
  %559 = vst [vmem:[#allocation2 + $0x30] sm:$0xff] %v555
  %560 = vst [vmem:[#allocation2 + $0x38] sm:$0xff] %v556
  %v561 = vsel %vm87, %v541, %v533
  %v562 = vsel %vm88, %v542, %v534
  %v563 = vsel %vm89, %v543, %v535
  %v564 = vsel %vm90, %v544, %v536
  %565 = vst [vmem:[#allocation2 + $0x40] sm:$0xff] %v561
  %566 = vst [vmem:[#allocation2 + $0x48] sm:$0xff] %v562
  %567 = vst [vmem:[#allocation2 + $0x50] sm:$0xff] %v563
  %568 = vst [vmem:[#allocation2 + $0x58] sm:$0xff] %v564
  %569 = vst [vmem:[#allocation2 + $0x60] sm:$0xff] %v525
  %570 = vst [vmem:[#allocation2 + $0x68] sm:$0xff] %v526
  %571 = vst [vmem:[#allocation2 + $0x70] sm:$0xff] %v527
  %572 = vst [vmem:[#allocation2 + $0x78] sm:$0xff] %v528
  %573 = vst [vmem:[#allocation2 + $0x80] sm:$0xff] %v421
  %574 = vst [vmem:[#allocation2 + $0x88] sm:$0xff] %v422
  %575 = vst [vmem:[#allocation2 + $0x90] sm:$0xff] %v423
  %576 = vst [vmem:[#allocation2 + $0x98] sm:$0xff] %v424
  %577 = vst [vmem:[#allocation2 + $0xa0] sm:$0xff] %v537
  %578 = vst [vmem:[#allocation2 + $0xa8] sm:$0xff] %v538
  %579 = vst [vmem:[#allocation2 + $0xb0] sm:$0xff] %v539
  %580 = vst [vmem:[#allocation2 + $0xb8] sm:$0xff] %v540
  %v581 = vsel %vm95, %v521, %v529
  %v582 = vsel %vm96, %v522, %v530
  %v583 = vsel %vm97, %v523, %v531
  %v584 = vsel %vm98, %v524, %v532
  %585 = vst [vmem:[#allocation2 + $0xc0] sm:$0xff] %v581
  %586 = vst [vmem:[#allocation2 + $0xc8] sm:$0xff] %v582
  %587 = vst [vmem:[#allocation2 + $0xd0] sm:$0xff] %v583
  %588 = vst [vmem:[#allocation2 + $0xd8] sm:$0xff] %v584
  %v589 = vsel %vm95, %v448, %v507
  %v590 = vsel %vm96, %v447, %v506
  %v591 = vsel %vm97, %v446, %v505
  %v592 = vsel %vm98, %v445, %v508
  %593 = vst [vmem:[#allocation2 + $0xe0] sm:$0xff] %v589
  %594 = vst [vmem:[#allocation2 + $0xe8] sm:$0xff] %v590
  %595 = vst [vmem:[#allocation2 + $0xf0] sm:$0xff] %v591
  %596 = vst [vmem:[#allocation2 + $0xf8] sm:$0xff] %v592
  %v597 = vsel %vm95, %v533, %v541
  %v598 = vsel %vm96, %v534, %v542
  %v599 = vsel %vm97, %v535, %v543
  %v600 = vsel %vm98, %v536, %v544
  %601 = vst [vmem:[#allocation2 + $0x100] sm:$0xff] %v597
  %602 = vst [vmem:[#allocation2 + $0x108] sm:$0xff] %v598
  %603 = vst [vmem:[#allocation2 + $0x110] sm:$0xff] %v599
  %604 = vst [vmem:[#allocation2 + $0x118] sm:$0xff] %v600
  %v605 = vld [vmem:[%s4] sm:$0xff]
  %v606 = vld [vmem:[#allocation2] sm:$0xff]
  %v607 = vld [vmem:[#allocation2 + $0x8] sm:$0xff]
  %v608 = vld [vmem:[#allocation2 + $0x10] sm:$0xff]
  %v609 = vld [vmem:[#allocation2 + $0x18] sm:$0xff]
  %v610 = vld [vmem:[#allocation2 + $0x20] sm:$0xff]
  %v611 = vld [vmem:[#allocation2 + $0x28] sm:$0xff]
  %v612 = vld [vmem:[#allocation2 + $0x30] sm:$0xff]
  %v613 = vld [vmem:[#allocation2 + $0x38] sm:$0xff]
  %v614 = vld [vmem:[#allocation2 + $0x40] sm:$0xff]
  %v615 = vld [vmem:[#allocation2 + $0x48] sm:$0xff]
  %v616 = vld [vmem:[#allocation2 + $0x50] sm:$0xff]
  %v617 = vld [vmem:[#allocation2 + $0x58] sm:$0xff]
  %v618 = vld [vmem:[#allocation2 + $0x60] sm:$0xff]
  %v619 = vld [vmem:[#allocation2 + $0x68] sm:$0xff]
  %v620 = vld [vmem:[#allocation2 + $0x70] sm:$0xff]
  %v621 = vld [vmem:[#allocation2 + $0x78] sm:$0xff]
  %v622 = vld [vmem:[#allocation2 + $0x80] sm:$0xff]
  %v623 = vld [vmem:[#allocation2 + $0x88] sm:$0xff]
  %v624 = vld [vmem:[#allocation2 + $0x90] sm:$0xff]
  %v625 = vld [vmem:[#allocation2 + $0x98] sm:$0xff]
  %v626 = vld [vmem:[#allocation2 + $0xa0] sm:$0xff]
  %v627 = vld [vmem:[#allocation2 + $0xa8] sm:$0xff]
  %v628 = vld [vmem:[#allocation2 + $0xb0] sm:$0xff]
  %v629 = vld [vmem:[#allocation2 + $0xb8] sm:$0xff]
  %v630 = vld [vmem:[#allocation2 + $0xc0] sm:$0xff]
  %v631 = vld [vmem:[#allocation2 + $0xc8] sm:$0xff]
  %v632 = vld [vmem:[#allocation2 + $0xd0] sm:$0xff]
  %v633 = vld [vmem:[#allocation2 + $0xd8] sm:$0xff]
  %v634 = vld [vmem:[#allocation2 + $0xe0] sm:$0xff]
  %v635 = vld [vmem:[#allocation2 + $0xe8] sm:$0xff]
  %v636 = vld [vmem:[#allocation2 + $0xf0] sm:$0xff]
  %v637 = vld [vmem:[#allocation2 + $0xf8] sm:$0xff]
  %v638 = vld [vmem:[#allocation2 + $0x100] sm:$0xff]
  %v639 = vld [vmem:[#allocation2 + $0x108] sm:$0xff]
  %v640 = vld [vmem:[#allocation2 + $0x110] sm:$0xff]
  %v641 = vld [vmem:[#allocation2 + $0x118] sm:$0xff]
  %v642 = vld [vmem:[%s5] sm:$0xff]
  %644 = vset.pattern.permute.xlu0 0
  %645 = vperm.xlu0 %644, %v642
  %v646 = vpop.permute.xlu0 %645
  %v649 = vsel %vm337, %v605, 0
  %651 = vmatpush.msra.mxu0 0.0
  %652 = vmatpush.msra.mxu0 0.0
  %653 = vmatpush.msra.mxu0 0.0
  %654 = vmatpush.msra.mxu0 0.0
  %655 = vmatpush.msra.mxu0 0.0
  %656 = vmatpush.msra.mxu0 0.0
  %657 = vmatpush.msra.mxu0 0.0
  %658 = vmatpush.msra.mxu0 %v638
  %659 = vmatpush.msra.mxu0 %v634
  %660 = vmatpush.msra.mxu0 %v630
  %661 = vmatpush.msra.mxu0 %v626
  %662 = vmatpush.msra.mxu0 %v622
  %663 = vmatpush.msra.mxu0 %v618
  %664 = vmatpush.msra.mxu0 %v614
  %665 = vmatpush.msra.mxu0 %v610
  %666 = vmatpush.msra.mxu0 %v606
  %667 = vmatmul.f32.gmra.mxu0 %v649
  %v668 = vpop.f32.mrf.mxu0
  %v669 = vadd.f32 %v646, %v668
  %670 = vdwg.mxu0
  %671 = vmatpush.msra.mxu0 0.0
  %672 = vmatpush.msra.mxu0 0.0
  %673 = vmatpush.msra.mxu0 0.0
  %674 = vmatpush.msra.mxu0 0.0
  %675 = vmatpush.msra.mxu0 0.0
  %676 = vmatpush.msra.mxu0 0.0
  %677 = vmatpush.msra.mxu0 0.0
  %678 = vmatpush.msra.mxu0 %v639
  %679 = vmatpush.msra.mxu0 %v635
  %680 = vmatpush.msra.mxu0 %v631
  %681 = vmatpush.msra.mxu0 %v627
  %682 = vmatpush.msra.mxu0 %v623
  %683 = vmatpush.msra.mxu0 %v619
  %684 = vmatpush.msra.mxu0 %v615
  %685 = vmatpush.msra.mxu0 %v611
  %686 = vmatpush.msra.mxu0 %v607
  %687 = vmatmul.f32.gmra.mxu0 %v649
  %v688 = vpop.f32.mrf.mxu0
  %v689 = vadd.f32 %v646, %v688
  %690 = vdwg.mxu0
  %691 = vmatpush.msra.mxu0 0.0
  %692 = vmatpush.msra.mxu0 0.0
  %693 = vmatpush.msra.mxu0 0.0
  %694 = vmatpush.msra.mxu0 0.0
  %695 = vmatpush.msra.mxu0 0.0
  %696 = vmatpush.msra.mxu0 0.0
  %697 = vmatpush.msra.mxu0 0.0
  %698 = vmatpush.msra.mxu0 %v640
  %699 = vmatpush.msra.mxu0 %v636
  %700 = vmatpush.msra.mxu0 %v632
  %701 = vmatpush.msra.mxu0 %v628
  %702 = vmatpush.msra.mxu0 %v624
  %703 = vmatpush.msra.mxu0 %v620
  %704 = vmatpush.msra.mxu0 %v616
  %705 = vmatpush.msra.mxu0 %v612
  %706 = vmatpush.msra.mxu0 %v608
  %707 = vmatmul.f32.gmra.mxu0 %v649
  %v708 = vpop.f32.mrf.mxu0
  %v709 = vadd.f32 %v646, %v708
  %710 = vdwg.mxu0
  %711 = vmatpush.msra.mxu0 0.0
  %712 = vmatpush.msra.mxu0 0.0
  %713 = vmatpush.msra.mxu0 0.0
  %714 = vmatpush.msra.mxu0 0.0
  %715 = vmatpush.msra.mxu0 0.0
  %716 = vmatpush.msra.mxu0 0.0
  %717 = vmatpush.msra.mxu0 0.0
  %718 = vmatpush.msra.mxu0 %v641
  %719 = vmatpush.msra.mxu0 %v637
  %720 = vmatpush.msra.mxu0 %v633
  %721 = vmatpush.msra.mxu0 %v629
  %722 = vmatpush.msra.mxu0 %v625
  %723 = vmatpush.msra.mxu0 %v621
  %724 = vmatpush.msra.mxu0 %v617
  %725 = vmatpush.msra.mxu0 %v613
  %726 = vmatpush.msra.mxu0 %v609
  %727 = vmatmul.f32.gmra.mxu0 %v649
  %v728 = vpop.f32.mrf.mxu0
  %v729 = vadd.f32 %v646, %v728
  %730 = vdwg.mxu0
  %v731 = vmax.f32 %v669, 0.0
  %v732 = vmax.f32 %v689, 0.0
  %v733 = vmax.f32 %v709, 0.0
  %v734 = vmax.f32 %v729, 0.0
  %735 = vrot.lane.b32.xlu0 %v731, 17
  %v736 = vpop.permute.xlu0 %735
  %737 = vrot.lane.b32.xlu0 %v732, 17
  %v738 = vpop.permute.xlu0 %737
  %739 = vrot.lane.b32.xlu0 %v733, 17
  %v740 = vpop.permute.xlu0 %739
  %741 = vrot.lane.b32.xlu0 %v734, 17
  %v742 = vpop.permute.xlu0 %741
  %v743 = vsel %vm114, %v740, %v742
  %v744 = vsel %vm114, %v738, %v740
  %v745 = vsel %vm114, %v736, %v738
  %v746 = vsel %vm114, %v742, %v736
  %747 = vrot.lane.b32.xlu0 %v731, 16
  %v748 = vpop.permute.xlu0 %747
  %749 = vrot.lane.b32.xlu0 %v732, 16
  %v750 = vpop.permute.xlu0 %749
  %751 = vrot.lane.b32.xlu0 %v733, 16
  %v752 = vpop.permute.xlu0 %751
  %753 = vrot.lane.b32.xlu0 %v734, 16
  %v754 = vpop.permute.xlu0 %753
  %v755 = vsel %vm127, %v752, %v754
  %v756 = vsel %vm127, %v750, %v752
  %v757 = vsel %vm127, %v748, %v750
  %v758 = vsel %vm127, %v754, %v748
  %759 = vrot.lane.b32.xlu0 %v731, 15
  %v760 = vpop.permute.xlu0 %759
  %761 = vrot.lane.b32.xlu0 %v732, 15
  %v762 = vpop.permute.xlu0 %761
  %763 = vrot.lane.b32.xlu0 %v733, 15
  %v764 = vpop.permute.xlu0 %763
  %765 = vrot.lane.b32.xlu0 %v734, 15
  %v766 = vpop.permute.xlu0 %765
  %v767 = vsel %vm140, %v764, %v766
  %v768 = vsel %vm140, %v762, %v764
  %v769 = vsel %vm140, %v760, %v762
  %v770 = vsel %vm140, %v766, %v760
  %771 = vrot.lane.b32.xlu0 %v731, 1
  %v772 = vpop.permute.xlu0 %771
  %773 = vrot.lane.b32.xlu0 %v732, 1
  %v774 = vpop.permute.xlu0 %773
  %775 = vrot.lane.b32.xlu0 %v733, 1
  %v776 = vpop.permute.xlu0 %775
  %777 = vrot.lane.b32.xlu0 %v734, 1
  %v778 = vpop.permute.xlu0 %777
  %v779 = vsel %vm153, %v776, %v778
  %v780 = vsel %vm153, %v774, %v776
  %v781 = vsel %vm153, %v772, %v774
  %v782 = vsel %vm153, %v778, %v772
  %783 = vrot.lane.b32.xlu0 %v731, 127
  %v784 = vpop.permute.xlu0 %783
  %785 = vrot.lane.b32.xlu0 %v732, 127
  %v786 = vpop.permute.xlu0 %785
  %787 = vrot.lane.b32.xlu0 %v733, 127
  %v788 = vpop.permute.xlu0 %787
  %789 = vrot.lane.b32.xlu0 %v734, 127
  %v790 = vpop.permute.xlu0 %789
  %v791 = vsel %vm166, %v788, %v790
  %v792 = vsel %vm166, %v786, %v788
  %v793 = vsel %vm166, %v784, %v786
  %v794 = vsel %vm166, %v790, %v784
  %795 = vrot.lane.b32.xlu0 %v731, 113
  %v796 = vpop.permute.xlu0 %795
  %797 = vrot.lane.b32.xlu0 %v732, 113
  %v798 = vpop.permute.xlu0 %797
  %799 = vrot.lane.b32.xlu0 %v733, 113
  %v800 = vpop.permute.xlu0 %799
  %801 = vrot.lane.b32.xlu0 %v734, 113
  %v802 = vpop.permute.xlu0 %801
  %v803 = vsel %vm179, %v800, %v802
  %v804 = vsel %vm179, %v798, %v800
  %v805 = vsel %vm179, %v796, %v798
  %v806 = vsel %vm179, %v802, %v796
  %807 = vrot.lane.b32.xlu0 %v731, 112
  %v808 = vpop.permute.xlu0 %807
  %809 = vrot.lane.b32.xlu0 %v732, 112
  %v810 = vpop.permute.xlu0 %809
  %811 = vrot.lane.b32.xlu0 %v733, 112
  %v812 = vpop.permute.xlu0 %811
  %813 = vrot.lane.b32.xlu0 %v734, 112
  %v814 = vpop.permute.xlu0 %813
  %v815 = vsel %vm192, %v812, %v814
  %v816 = vsel %vm192, %v810, %v812
  %v817 = vsel %vm192, %v808, %v810
  %v818 = vsel %vm192, %v814, %v808
  %819 = vrot.lane.b32.xlu0 %v731, 111
  %v820 = vpop.permute.xlu0 %819
  %821 = vrot.lane.b32.xlu0 %v732, 111
  %v822 = vpop.permute.xlu0 %821
  %823 = vrot.lane.b32.xlu0 %v733, 111
  %v824 = vpop.permute.xlu0 %823
  %825 = vrot.lane.b32.xlu0 %v734, 111
  %v826 = vpop.permute.xlu0 %825
  %v827 = vsel %vm205, %v824, %v826
  %v828 = vsel %vm205, %v822, %v824
  %v829 = vsel %vm205, %v820, %v822
  %v830 = vsel %vm205, %v826, %v820
  %v831 = vsel %vm63, %v770, %v746
  %v832 = vsel %vm64, %v769, %v745
  %v833 = vsel %vm65, %v768, %v744
  %v834 = vsel %vm66, %v767, %v743
  %v835 = vsel %vm63, %v793, %v782
  %v836 = vsel %vm64, %v792, %v781
  %v837 = vsel %vm65, %v791, %v780
  %v838 = vsel %vm66, %v794, %v779
  %v839 = vsel %vm63, %v829, %v805
  %v840 = vsel %vm64, %v828, %v804
  %v841 = vsel %vm65, %v827, %v803
  %v842 = vsel %vm66, %v830, %v806
  %v843 = vsel %vm79, %v746, %v770
  %v844 = vsel %vm80, %v745, %v769
  %v845 = vsel %vm81, %v744, %v768
  %v846 = vsel %vm82, %v743, %v767
  %v847 = vsel %vm79, %v782, %v793
  %v848 = vsel %vm80, %v781, %v792
  %v849 = vsel %vm81, %v780, %v791
  %v850 = vsel %vm82, %v779, %v794
  %v851 = vsel %vm79, %v805, %v829
  %v852 = vsel %vm80, %v804, %v828
  %v853 = vsel %vm81, %v803, %v827
  %v854 = vsel %vm82, %v806, %v830
  %v855 = vsel %vm87, %v839, %v831
  %v856 = vsel %vm88, %v840, %v832
  %v857 = vsel %vm89, %v841, %v833
  %v858 = vsel %vm90, %v842, %v834
  %859 = vst [vmem:[#allocation2] sm:$0xff] %v855
  %860 = vst [vmem:[#allocation2 + $0x8] sm:$0xff] %v856
  %861 = vst [vmem:[#allocation2 + $0x10] sm:$0xff] %v857
  %862 = vst [vmem:[#allocation2 + $0x18] sm:$0xff] %v858
  %v863 = vsel %vm87, %v817, %v758
  %v864 = vsel %vm88, %v816, %v757
  %v865 = vsel %vm89, %v815, %v756
  %v866 = vsel %vm90, %v818, %v755
  %867 = vst [vmem:[#allocation2 + $0x20] sm:$0xff] %v863
  %868 = vst [vmem:[#allocation2 + $0x28] sm:$0xff] %v864
  %869 = vst [vmem:[#allocation2 + $0x30] sm:$0xff] %v865
  %870 = vst [vmem:[#allocation2 + $0x38] sm:$0xff] %v866
  %v871 = vsel %vm87, %v851, %v843
  %v872 = vsel %vm88, %v852, %v844
  %v873 = vsel %vm89, %v853, %v845
  %v874 = vsel %vm90, %v854, %v846
  %875 = vst [vmem:[#allocation2 + $0x40] sm:$0xff] %v871
  %876 = vst [vmem:[#allocation2 + $0x48] sm:$0xff] %v872
  %877 = vst [vmem:[#allocation2 + $0x50] sm:$0xff] %v873
  %878 = vst [vmem:[#allocation2 + $0x58] sm:$0xff] %v874
  %879 = vst [vmem:[#allocation2 + $0x60] sm:$0xff] %v835
  %880 = vst [vmem:[#allocation2 + $0x68] sm:$0xff] %v836
  %881 = vst [vmem:[#allocation2 + $0x70] sm:$0xff] %v837
  %882 = vst [vmem:[#allocation2 + $0x78] sm:$0xff] %v838
  %883 = vst [vmem:[#allocation2 + $0x80] sm:$0xff] %v731
  %884 = vst [vmem:[#allocation2 + $0x88] sm:$0xff] %v732
  %885 = vst [vmem:[#allocation2 + $0x90] sm:$0xff] %v733
  %886 = vst [vmem:[#allocation2 + $0x98] sm:$0xff] %v734
  %887 = vst [vmem:[#allocation2 + $0xa0] sm:$0xff] %v847
  %888 = vst [vmem:[#allocation2 + $0xa8] sm:$0xff] %v848
  %889 = vst [vmem:[#allocation2 + $0xb0] sm:$0xff] %v849
  %890 = vst [vmem:[#allocation2 + $0xb8] sm:$0xff] %v850
  %v891 = vsel %vm95, %v831, %v839
  %v892 = vsel %vm96, %v832, %v840
  %v893 = vsel %vm97, %v833, %v841
  %v894 = vsel %vm98, %v834, %v842
  %895 = vst [vmem:[#allocation2 + $0xc0] sm:$0xff] %v891
  %896 = vst [vmem:[#allocation2 + $0xc8] sm:$0xff] %v892
  %897 = vst [vmem:[#allocation2 + $0xd0] sm:$0xff] %v893
  %898 = vst [vmem:[#allocation2 + $0xd8] sm:$0xff] %v894
  %v899 = vsel %vm95, %v758, %v817
  %v900 = vsel %vm96, %v757, %v816
  %v901 = vsel %vm97, %v756, %v815
  %v902 = vsel %vm98, %v755, %v818
  %903 = vst [vmem:[#allocation2 + $0xe0] sm:$0xff] %v899
  %904 = vst [vmem:[#allocation2 + $0xe8] sm:$0xff] %v900
  %905 = vst [vmem:[#allocation2 + $0xf0] sm:$0xff] %v901
  %906 = vst [vmem:[#allocation2 + $0xf8] sm:$0xff] %v902
  %v907 = vsel %vm95, %v843, %v851
  %v908 = vsel %vm96, %v844, %v852
  %v909 = vsel %vm97, %v845, %v853
  %v910 = vsel %vm98, %v846, %v854
  %911 = vst [vmem:[#allocation2 + $0x100] sm:$0xff] %v907
  %912 = vst [vmem:[#allocation2 + $0x108] sm:$0xff] %v908
  %913 = vst [vmem:[#allocation2 + $0x110] sm:$0xff] %v909
  %914 = vst [vmem:[#allocation2 + $0x118] sm:$0xff] %v910
  %v915 = vld [vmem:[%s6] sm:$0xf]
  %v916 = vld [vmem:[#allocation2] sm:$0xff]
  %v917 = vld [vmem:[#allocation2 + $0x8] sm:$0xff]
  %v918 = vld [vmem:[#allocation2 + $0x10] sm:$0xff]
  %v919 = vld [vmem:[#allocation2 + $0x18] sm:$0xff]
  %v920 = vld [vmem:[#allocation2 + $0x20] sm:$0xff]
  %v921 = vld [vmem:[#allocation2 + $0x28] sm:$0xff]
  %v922 = vld [vmem:[#allocation2 + $0x30] sm:$0xff]
  %v923 = vld [vmem:[#allocation2 + $0x38] sm:$0xff]
  %v924 = vld [vmem:[#allocation2 + $0x40] sm:$0xff]
  %v925 = vld [vmem:[#allocation2 + $0x48] sm:$0xff]
  %v926 = vld [vmem:[#allocation2 + $0x50] sm:$0xff]
  %v927 = vld [vmem:[#allocation2 + $0x58] sm:$0xff]
  %v928 = vld [vmem:[#allocation2 + $0x60] sm:$0xff]
  %v929 = vld [vmem:[#allocation2 + $0x68] sm:$0xff]
  %v930 = vld [vmem:[#allocation2 + $0x70] sm:$0xff]
  %v931 = vld [vmem:[#allocation2 + $0x78] sm:$0xff]
  %v932 = vld [vmem:[#allocation2 + $0x80] sm:$0xff]
  %v933 = vld [vmem:[#allocation2 + $0x88] sm:$0xff]
  %v934 = vld [vmem:[#allocation2 + $0x90] sm:$0xff]
  %v935 = vld [vmem:[#allocation2 + $0x98] sm:$0xff]
  %v936 = vld [vmem:[#allocation2 + $0xa0] sm:$0xff]
  %v937 = vld [vmem:[#allocation2 + $0xa8] sm:$0xff]
  %v938 = vld [vmem:[#allocation2 + $0xb0] sm:$0xff]
  %v939 = vld [vmem:[#allocation2 + $0xb8] sm:$0xff]
  %v940 = vld [vmem:[#allocation2 + $0xc0] sm:$0xff]
  %v941 = vld [vmem:[#allocation2 + $0xc8] sm:$0xff]
  %v942 = vld [vmem:[#allocation2 + $0xd0] sm:$0xff]
  %v943 = vld [vmem:[#allocation2 + $0xd8] sm:$0xff]
  %v944 = vld [vmem:[#allocation2 + $0xe0] sm:$0xff]
  %v945 = vld [vmem:[#allocation2 + $0xe8] sm:$0xff]
  %v946 = vld [vmem:[#allocation2 + $0xf0] sm:$0xff]
  %v947 = vld [vmem:[#allocation2 + $0xf8] sm:$0xff]
  %v948 = vld [vmem:[#allocation2 + $0x100] sm:$0xff]
  %v949 = vld [vmem:[#allocation2 + $0x108] sm:$0xff]
  %v950 = vld [vmem:[#allocation2 + $0x110] sm:$0xff]
  %v951 = vld [vmem:[#allocation2 + $0x118] sm:$0xff]
  %v952 = vld [vmem:[%s7] sm:$0xf]
  %954 = vset.pattern.permute.xlu0 0
  %955 = vperm.xlu0 %954, %v952
  %v956 = vpop.permute.xlu0 %955
  %v959 = vsel %vm337, %v915, 0
  %961 = vmatpush.msra.mxu0 0.0
  %962 = vmatpush.msra.mxu0 0.0
  %963 = vmatpush.msra.mxu0 0.0
  %964 = vmatpush.msra.mxu0 0.0
  %965 = vmatpush.msra.mxu0 0.0
  %966 = vmatpush.msra.mxu0 0.0
  %967 = vmatpush.msra.mxu0 0.0
  %968 = vmatpush.msra.mxu0 %v948
  %969 = vmatpush.msra.mxu0 %v944
  %970 = vmatpush.msra.mxu0 %v940
  %971 = vmatpush.msra.mxu0 %v936
  %972 = vmatpush.msra.mxu0 %v932
  %973 = vmatpush.msra.mxu0 %v928
  %974 = vmatpush.msra.mxu0 %v924
  %975 = vmatpush.msra.mxu0 %v920
  %976 = vmatpush.msra.mxu0 %v916
  %977 = vmatmul.f32.gmra.mxu0 %v959
  %v978 = vpop.f32.mrf.mxu0
  %v979 = vadd.f32 %v956, %v978
  %980 = vdwg.mxu0
  %981 = vmatpush.msra.mxu0 0.0
  %982 = vmatpush.msra.mxu0 0.0
  %983 = vmatpush.msra.mxu0 0.0
  %984 = vmatpush.msra.mxu0 0.0
  %985 = vmatpush.msra.mxu0 0.0
  %986 = vmatpush.msra.mxu0 0.0
  %987 = vmatpush.msra.mxu0 0.0
  %988 = vmatpush.msra.mxu0 %v949
  %989 = vmatpush.msra.mxu0 %v945
  %990 = vmatpush.msra.mxu0 %v941
  %991 = vmatpush.msra.mxu0 %v937
  %992 = vmatpush.msra.mxu0 %v933
  %993 = vmatpush.msra.mxu0 %v929
  %994 = vmatpush.msra.mxu0 %v925
  %995 = vmatpush.msra.mxu0 %v921
  %996 = vmatpush.msra.mxu0 %v917
  %997 = vmatmul.f32.gmra.mxu0 %v959
  %v998 = vpop.f32.mrf.mxu0
  %v999 = vadd.f32 %v956, %v998
  %1000 = vdwg.mxu0
  %1001 = vmatpush.msra.mxu0 0.0
  %1002 = vmatpush.msra.mxu0 0.0
  %1003 = vmatpush.msra.mxu0 0.0
  %1004 = vmatpush.msra.mxu0 0.0
  %1005 = vmatpush.msra.mxu0 0.0
  %1006 = vmatpush.msra.mxu0 0.0
  %1007 = vmatpush.msra.mxu0 0.0
  %1008 = vmatpush.msra.mxu0 %v950
  %1009 = vmatpush.msra.mxu0 %v946
  %1010 = vmatpush.msra.mxu0 %v942
  %1011 = vmatpush.msra.mxu0 %v938
  %1012 = vmatpush.msra.mxu0 %v934
  %1013 = vmatpush.msra.mxu0 %v930
  %1014 = vmatpush.msra.mxu0 %v926
  %1015 = vmatpush.msra.mxu0 %v922
  %1016 = vmatpush.msra.mxu0 %v918
  %1017 = vmatmul.f32.gmra.mxu0 %v959
  %v1018 = vpop.f32.mrf.mxu0
  %v1019 = vadd.f32 %v956, %v1018
  %1020 = vdwg.mxu0
  %1021 = vmatpush.msra.mxu0 0.0
  %1022 = vmatpush.msra.mxu0 0.0
  %1023 = vmatpush.msra.mxu0 0.0
  %1024 = vmatpush.msra.mxu0 0.0
  %1025 = vmatpush.msra.mxu0 0.0
  %1026 = vmatpush.msra.mxu0 0.0
  %1027 = vmatpush.msra.mxu0 0.0
  %1028 = vmatpush.msra.mxu0 %v951
  %1029 = vmatpush.msra.mxu0 %v947
  %1030 = vmatpush.msra.mxu0 %v943
  %1031 = vmatpush.msra.mxu0 %v939
  %1032 = vmatpush.msra.mxu0 %v935
  %1033 = vmatpush.msra.mxu0 %v931
  %1034 = vmatpush.msra.mxu0 %v927
  %1035 = vmatpush.msra.mxu0 %v923
  %1036 = vmatpush.msra.mxu0 %v919
  %1037 = vmatmul.f32.gmra.mxu0 %v959
  %v1038 = vpop.f32.mrf.mxu0
  %v1039 = vadd.f32 %v956, %v1038
  %1040 = vdwg.mxu0
  %v1041 = vmax.f32 %v979, 0.0
  %v1042 = vmax.f32 %v999, 0.0
  %v1043 = vmax.f32 %v1019, 0.0
  %v1044 = vmax.f32 %v1039, 0.0
  %v1047 = vrot.slane %v1042, 4
  %v1048 = vsel %vm99, %v1041, %v1047
  %1050 = vst [vmem:[%s8] sm:$0xff] %v1048
  %v1053 = vrot.slane %v1044, 4
  %v1054 = vsel %vm99, %v1043, %v1053
  %s1056 = scalar_lea.vmem %s8, 8
  %1057 = vst [vmem:[%s1056] sm:$0xff] %v1054
  // Predicated region
  $region34: #{triple_conv_forward.1} parent=0 // pred_check
    _
  $region35: #{triple_conv_forward.1} parent=0 // pred_check_branch
    %1059 = sbr.rel (0) target = $region37
  $region36: #{triple_conv_forward.1} parent=0 // pred_region
    _
  $region37: #{triple_conv_forward.1} parent=0 // pred_fallthru
    _
  // Predicated region
  $region38: #{triple_conv_forward.1} parent=0 // pred_check
    _
  $region39: #{triple_conv_forward.1} parent=0 // pred_check_branch
    %1061 = sbr.rel (0) target = $region41
  $region40: #{triple_conv_forward.1} parent=0 // pred_region
    _
  $region41: #{triple_conv_forward.1} parent=0 // pred_fallthru
    _

</llo_original>
